<compile_context>
chip_gen: v6e
topology: v6e:2x2x1
jax: 0.10.0
libtpu: 0.0.40
codegen_flags: <defaults>
</compile_context>

<pallas_src>
import math

import jax
import jax.numpy as jnp
from jax.experimental import pallas as pl
from jax.experimental.pallas import tpu as pltpu


# ----------------- small config consistent with the module -----------------
B = 2                 # batch
S = 8                 # seq len
DIM = 32              # model dim
N_HEADS = 4
HEAD_DIM = DIM // N_HEADS
MULTIPLE_OF = 16
EPS = 1e-5
NEG_INF = -1e30       # stands in for float('-inf') in the causal mask


def _ffn_hidden(dim: int, multiple_of: int) -> int:
    hidden = 4 * dim
    hidden = int(2 * hidden / 3)
    hidden = multiple_of * ((hidden + multiple_of - 1) // multiple_of)
    return hidden


HIDDEN = _ffn_hidden(DIM, MULTIPLE_OF)   # = 96 for DIM=32, multiple_of=16


# ----------------------------- Pallas kernel -------------------------------
def make_block_kernel(n_heads: int, head_dim: int, hidden: int, eps: float):
    dim = n_heads * head_dim

    def kernel(x_ref, attn_nw_ref, wqkv_ref, cos_ref, sin_ref,
               wo_ref, ffn_nw_ref, w13_ref, w2_ref, out_ref):
        x = x_ref[0]                                          # (S, D) f32
        seq = x.shape[0]

        # --- causal additive mask, generated in-kernel (iota + select) ---
        row = jax.lax.broadcasted_iota(jnp.int32, (seq, seq), 0)
        col = jax.lax.broadcasted_iota(jnp.int32, (seq, seq), 1)
        mask = jnp.where(row >= col, 0.0, NEG_INF).astype(jnp.float32)

        # --- RMSNorm (attention_norm), f32 elementwise ---
        ms = jnp.mean(x * x, axis=-1, keepdims=True)
        xn = x * jax.lax.rsqrt(ms + eps) * attn_nw_ref[...]   # (S, D)

        # --- fused projection [Wq*s | Wk | Wq@R*s | Wk@R | Wv]: one wide MXU matmul.
        #     (R = fixed pair-rotation matrix; s = 1/sqrt(head_dim) folded in.)
        proj = jnp.dot(xn.astype(jnp.bfloat16), wqkv_ref[...],
                       preferred_element_type=jnp.float32)    # (S, 5D) f32
        qk = proj[:, :2 * dim]                                # [q | k]
        qkr = proj[:, 2 * dim:4 * dim]                        # [q@R | k@R]
        v = proj[:, 4 * dim:]                                 # (S, D)

        # --- RoPE: one wide fma on the contiguous [q|k] slab (f32) ---
        qk = qk * cos_ref[...] + qkr * sin_ref[...]           # (S, 2D)

        # hoisted single casts (not per-head)
        qk_bf = qk.astype(jnp.bfloat16)
        v_bf = v.astype(jnp.bfloat16)

        # --- attention: per-head (S, S) scores within this batch only ---
        dn = (((1,), (1,)), ((), ()))                         # contract last dims
        head_outs = []
        for h in range(n_heads):
            lo = h * head_dim
            hi = lo + head_dim
            qh = qk_bf[:, lo:hi]                              # (S, hd)
            kh = qk_bf[:, dim + lo:dim + hi]
            vh = v_bf[:, lo:hi]
            s = jax.lax.dot_general(qh, kh, dn,
                                    preferred_element_type=jnp.float32)
            s = s + mask                                      # scale already folded
            s = s - jnp.max(s, axis=-1, keepdims=True)
            p = jnp.exp(s)
            p = p * pl.reciprocal(jnp.sum(p, axis=-1, keepdims=True),
                                  approx=True)
            head_outs.append(jnp.dot(p.astype(jnp.bfloat16), vh,
                                     preferred_element_type=jnp.float32))
        attn = jnp.concatenate(head_outs, axis=-1)            # (S, D)

        # --- output projection + residual (f32 add) ---
        h1 = x + jnp.dot(attn.astype(jnp.bfloat16), wo_ref[...],
                         preferred_element_type=jnp.float32)

        # --- RMSNorm (ffn_norm) ---
        ms2 = jnp.mean(h1 * h1, axis=-1, keepdims=True)
        hn = h1 * jax.lax.rsqrt(ms2 + eps) * ffn_nw_ref[...]

        # --- SwiGLU with fused [W1 | W3] matmul ---
        ab = jnp.dot(hn.astype(jnp.bfloat16), w13_ref[...],
                     preferred_element_type=jnp.float32)      # (S, 2*HIDDEN)
        a = ab[:, :hidden]
        b = ab[:, hidden:]
        g = (a * jax.nn.sigmoid(a)) * b                       # silu(a) * b, f32

        out_ref[0] = h1 + jnp.dot(g.astype(jnp.bfloat16), w2_ref[...],
                                  preferred_element_type=jnp.float32)

    return kernel


# ------------------------------ wrapper -------------------------------------
def transformer_block(x, kparams, cos2, sin2):
    Bn, Sn, Dn = x.shape

    def resident(shape):
        # VMEM-resident across the batch grid (block index never changes)
        return pl.BlockSpec(shape, lambda b: (0,) * len(shape))

    in_specs = [
        pl.BlockSpec((1, Sn, Dn), lambda b: (b, 0, 0)),   # x: one batch per step
        resident((1, Dn)),                                # attention_norm weight (f32)
        resident((Dn, 5 * Dn)),                           # [Wq*s|Wk|Wq@R*s|Wk@R|Wv] bf16
        resident((Sn, 2 * Dn)),                           # cos for [q|k] slab (f32)
        resident((Sn, 2 * Dn)),                           # sin for [q|k] slab (f32)
        resident((Dn, Dn)),                               # Wo (bf16)
        resident((1, Dn)),                                # ffn_norm weight (f32)
        resident((Dn, 2 * HIDDEN)),                       # [W1|W3] (bf16)
        resident((HIDDEN, Dn)),                           # W2 (bf16)
    ]
    out_specs = pl.BlockSpec((1, Sn, Dn), lambda b: (b, 0, 0))

    # advisory cost estimate for XLA scheduling around the fused call
    flops = int(Bn * (2 * Sn * Dn * 5 * Dn      # fused qkv(+rope) projection
                      + 4 * Sn * Sn * Dn        # scores + PV over all heads
                      + 2 * Sn * Dn * Dn        # Wo
                      + 4 * Sn * Dn * HIDDEN    # W1|W3
                      + 2 * Sn * HIDDEN * Dn))  # W2
    transcendentals = int(Bn * (N_HEADS * Sn * Sn      # exp in softmax
                                + N_HEADS * Sn         # reciprocal
                                + 2 * Sn               # rsqrt (two norms)
                                + Sn * HIDDEN))        # sigmoid in SiLU
    bytes_accessed = int(
        2 * Bn * Sn * Dn * 4                       # x in + out (f32)
        + kparams["wqkv_fused"].size * 2
        + kparams["wo_bf16"].size * 2
        + kparams["w13_fused"].size * 2
        + kparams["w2_bf16"].size * 2
        + 2 * Dn * 4                               # norm weights (f32)
        + 2 * Sn * 2 * Dn * 4)                     # cos2/sin2 (f32)

    return pl.pallas_call(
        make_block_kernel(N_HEADS, HEAD_DIM, HIDDEN, EPS),
        out_shape=jax.ShapeDtypeStruct((Bn, Sn, Dn), jnp.float32),
        grid=(Bn,),
        in_specs=in_specs,
        out_specs=out_specs,
        compiler_params=pltpu.CompilerParams(
            dimension_semantics=("parallel",),
            vmem_limit_bytes=32 * 1024 * 1024),
        cost_estimate=pl.CostEstimate(flops=flops,
                                      transcendentals=transcendentals,
                                      bytes_accessed=bytes_accessed),
    )(x, kparams["attn_norm"], kparams["wqkv_fused"], cos2, sin2,
      kparams["wo_bf16"], kparams["ffn_norm"], kparams["w13_fused"],
      kparams["w2_bf16"])


def prepare_kernel_params(params):
    """Host-side one-time weight prep: fuse QKV (+RoPE rotation, +1/sqrt(hd) scale)
    and W1/W3, cast matmul weights to bf16."""
    dim = params["wq"].shape[0]
    scale = 1.0 / math.sqrt(HEAD_DIM)
    # pair-rotation matrix R:  (x @ R)[2i] = -x[2i+1], (x @ R)[2i+1] = x[2i]
    idx = jnp.arange(0, dim, 2)
    R = jnp.zeros((dim, dim), dtype=jnp.float32)
    R = R.at[idx + 1, idx].set(-1.0)
    R = R.at[idx, idx + 1].set(1.0)
    wq_s = params["wq"] * scale                      # fold attention scale into Wq
    wqkv = jnp.concatenate(
        [wq_s, params["wk"], wq_s @ R, params["wk"] @ R, params["wv"]],
        axis=1).astype(jnp.bfloat16)                 # (D, 5D): [q|k|qR|kR|v]
    w13 = jnp.concatenate([params["w1"], params["w3"]],
                          axis=1).astype(jnp.bfloat16)
    return {
        "attn_norm": params["attn_norm"],
        "ffn_norm": params["ffn_norm"],
        "wqkv_fused": wqkv,                          # (D, 5D) bf16
        "wo_bf16": params["wo"].astype(jnp.bfloat16),
        "w13_fused": w13,                            # (D, 2*HIDDEN) bf16
        "w2_bf16": params["w2"].astype(jnp.bfloat16),
    }


# ------------------------- pure-JAX reference ------------------------------
def reference_block(x, params, cos_half, sin_half, mask):
    def rms(t, w):
        return t * jax.lax.rsqrt(jnp.mean(t * t, -1, keepdims=True) + EPS) * w

    Bn, Sn, Dn = x.shape
    xn = rms(x, params["attn_norm"][0])
    q = (xn @ params["wq"]).reshape(Bn, Sn, N_HEADS, HEAD_DIM)
    k = (xn @ params["wk"]).reshape(Bn, Sn, N_HEADS, HEAD_DIM)
    v = (xn @ params["wv"]).reshape(Bn, Sn, N_HEADS, HEAD_DIM)

    def rope(t):
        te, to = t[..., 0::2], t[..., 1::2]
        c = cos_half[None, :, None, :]
        s = sin_half[None, :, None, :]
        oe = te * c - to * s
        oo = te * s + to * c
        return jnp.stack([oe, oo], axis=-1).reshape(t.shape)

    q, k = rope(q), rope(k)
    q = q.transpose(0, 2, 1, 3)
    k = k.transpose(0, 2, 1, 3)
    v = v.transpose(0, 2, 1, 3)
    scores = jnp.einsum("bhqd,bhkd->bhqk", q, k) / math.sqrt(HEAD_DIM)
    scores = scores + mask[None, None]
    p = jax.nn.softmax(scores, axis=-1)
    o = jnp.einsum("bhqk,bhkd->bhqd", p, v)
    o = o.transpose(0, 2, 1, 3).reshape(Bn, Sn, Dn)
    h = x + o @ params["wo"]

    hn = rms(h, params["ffn_norm"][0])
    g = jax.nn.silu(hn @ params["w1"]) * (hn @ params["w3"])
    return h + g @ params["w2"]


# --------------------------------- main -------------------------------------
if __name__ == "__main__":
    key = jax.random.PRNGKey(0)
    ks = jax.random.split(key, 10)

    def init(k, shape, scale=0.05):
        return (scale * jax.random.normal(k, shape)).astype(jnp.float32)

    params = {
        "attn_norm": (1.0 + init(ks[0], (1, DIM), 0.1)),
        "ffn_norm":  (1.0 + init(ks[1], (1, DIM), 0.1)),
        "wq": init(ks[2], (DIM, DIM)),          # pre-transposed: [in, out]
        "wk": init(ks[3], (DIM, DIM)),
        "wv": init(ks[4], (DIM, DIM)),
        "wo": init(ks[5], (DIM, DIM)),
        "w1": init(ks[6], (DIM, HIDDEN)),
        "w3": init(ks[7], (DIM, HIDDEN)),
        "w2": init(ks[8], (HIDDEN, DIM)),
    }

    x = jax.random.normal(ks[9], (B, S, DIM), dtype=jnp.float32)

    # freqs_cis (standard LLaMA precompute, theta=10000), given as cos/sin
    freqs = 1.0 / (10000.0 ** (jnp.arange(0, HEAD_DIM, 2, dtype=jnp.float32)
                               / HEAD_DIM))                    # (HEAD_DIM/2,)
    angles = jnp.arange(S, dtype=jnp.float32)[:, None] * freqs[None, :]  # (S, HD/2)
    cos_half = jnp.cos(angles)
    sin_half = jnp.sin(angles)

    # expand to full model-dim layout (interleaved pairs, replicated per head),
    # then duplicate once along the feature axis so RoPE is one fma on the
    # contiguous [q|k] slab.  No pre-broadcast over batch.
    cos_full = jnp.tile(jnp.repeat(cos_half, 2, axis=1), (1, N_HEADS))   # (S, D)
    sin_full = jnp.tile(jnp.repeat(sin_half, 2, axis=1), (1, N_HEADS))   # (S, D)
    cos2 = jnp.concatenate([cos_full, cos_full], axis=1)                 # (S, 2D)
    sin2 = jnp.concatenate([sin_full, sin_full], axis=1)

    kparams = prepare_kernel_params(params)
    out = transformer_block(x, kparams, cos2, sin2)
    out = jax.block_until_ready(out)

    mask_ref = jnp.triu(jnp.full((S, S), NEG_INF, dtype=jnp.float32), k=1)
    ref = reference_block(x, params, cos_half, sin_half, mask_ref)
    max_err = float(jnp.max(jnp.abs(out - ref)))
    assert out.shape == (B, S, DIM)
    # bf16 MXU inputs (f32 accumulation) + approximate reciprocal introduce
    # ~1e-3-level error; tolerance kept loose for safety.
    assert max_err < 2e-2, f"mismatch vs reference: max abs err = {max_err}"

    print("KERNEL_OK")
</pallas_src>

<mosaic_0001>
module attributes {stable_mosaic.version = 11 : i64} {
  func.func @kernel(%arg0: i32, %arg1: memref<1x8x32xf32, #tpu.memory_space<vmem>>, %arg2: memref<1x32xf32, #tpu.memory_space<vmem>>, %arg3: memref<32x160xbf16, #tpu.memory_space<vmem>>, %arg4: memref<8x64xf32, #tpu.memory_space<vmem>>, %arg5: memref<8x64xf32, #tpu.memory_space<vmem>>, %arg6: memref<32x32xbf16, #tpu.memory_space<vmem>>, %arg7: memref<1x32xf32, #tpu.memory_space<vmem>>, %arg8: memref<32x192xbf16, #tpu.memory_space<vmem>>, %arg9: memref<96x32xbf16, #tpu.memory_space<vmem>>, %arg10: memref<1x8x32xf32, #tpu.memory_space<vmem>>) attributes {dimension_semantics = [#tpu.dimension_semantics<parallel>], iteration_bounds = array<i64: 2>, scalar_prefetch = 0 : i64, scratch_operands = 0 : i64, tpu.core_type = #tpu.core_type<tc>, window_params = [{transform_indices = @transform_0, window_bounds = array<i64: 1, 8, 32>}, {pipeline_mode = #tpu.pipeline_mode<synchronous>, transform_indices = @transform_1, window_bounds = array<i64: 1, 32>}, {pipeline_mode = #tpu.pipeline_mode<synchronous>, transform_indices = @transform_2, window_bounds = array<i64: 32, 160>}, {pipeline_mode = #tpu.pipeline_mode<synchronous>, transform_indices = @transform_3, window_bounds = array<i64: 8, 64>}, {pipeline_mode = #tpu.pipeline_mode<synchronous>, transform_indices = @transform_4, window_bounds = array<i64: 8, 64>}, {pipeline_mode = #tpu.pipeline_mode<synchronous>, transform_indices = @transform_5, window_bounds = array<i64: 32, 32>}, {pipeline_mode = #tpu.pipeline_mode<synchronous>, transform_indices = @transform_6, window_bounds = array<i64: 1, 32>}, {pipeline_mode = #tpu.pipeline_mode<synchronous>, transform_indices = @transform_7, window_bounds = array<i64: 32, 192>}, {pipeline_mode = #tpu.pipeline_mode<synchronous>, transform_indices = @transform_8, window_bounds = array<i64: 96, 32>}, {transform_indices = @transform_9, window_bounds = array<i64: 1, 8, 32>}]} {
    %c0 = arith.constant 0 : index
    %c0_0 = arith.constant 0 : index
    %c0_1 = arith.constant 0 : index
    %0 = vector.load %arg1[%c0, %c0_0, %c0_1] : memref<1x8x32xf32, #tpu.memory_space<vmem>>, vector<1x8x32xf32>
    %1 = vector.shape_cast %0 : vector<1x8x32xf32> to vector<8x32xf32>
    %2 = tpu.iota {dimensions = array<i32: 0>} : vector<8x8xi32>
    %3 = tpu.iota {dimensions = array<i32: 1>} : vector<8x8xi32>
    %4 = arith.cmpi sge, %2, %3 : vector<8x8xi32>
    %cst = arith.constant 0.000000e+00 : f32
    %cst_2 = arith.constant -1.000000e+30 : f32
    %5 = vector.broadcast %cst : f32 to vector<8x8xf32>
    %6 = vector.broadcast %cst_2 : f32 to vector<8x8xf32>
    %7 = arith.select %4, %5, %6 : vector<8x8xi1>, vector<8x8xf32>
    %8 = arith.mulf %1, %1 : vector<8x32xf32>
    %cst_3 = arith.constant dense<0.000000e+00> : vector<8xf32>
    %9 = vector.multi_reduction <add>, %8, %cst_3 [1] : vector<8x32xf32> to vector<8xf32>
    %10 = vector.shape_cast %9 : vector<8xf32> to vector<8x1xf32>
    %cst_4 = arith.constant 3.200000e+01 : f32
    %11 = vector.broadcast %cst_4 : f32 to vector<8x1xf32>
    %12 = arith.divf %10, %11 : vector<8x1xf32>
    %cst_5 = arith.constant 9.99999974E-6 : f32
    %13 = vector.broadcast %cst_5 : f32 to vector<8x1xf32>
    %14 = arith.addf %12, %13 : vector<8x1xf32>
    %15 = math.rsqrt %14 : vector<8x1xf32>
    %16 = vector.broadcast %15 : vector<8x1xf32> to vector<8x32xf32>
    %17 = arith.mulf %1, %16 : vector<8x32xf32>
    %c0_6 = arith.constant 0 : index
    %c0_7 = arith.constant 0 : index
    %18 = vector.load %arg2[%c0_6, %c0_7] : memref<1x32xf32, #tpu.memory_space<vmem>>, vector<1x32xf32>
    %19 = vector.broadcast %18 : vector<1x32xf32> to vector<8x32xf32>
    %20 = arith.mulf %17, %19 : vector<8x32xf32>
    %21 = arith.truncf %20 : vector<8x32xf32> to vector<8x32xbf16>
    %c0_8 = arith.constant 0 : index
    %c0_9 = arith.constant 0 : index
    %22 = vector.load %arg3[%c0_8, %c0_9] : memref<32x160xbf16, #tpu.memory_space<vmem>>, vector<32x160xbf16>
    %cst_10 = arith.constant dense<0.000000e+00> : vector<8x160xf32>
    %23 = tpu.matmul %21, %22, %cst_10 {dimension_numbers = #tpu.dot_dimension_numbers<[1], [0], [0], [1], [0, 0, 1, 1], [], []>} : vector<8x32xbf16>, vector<32x160xbf16>, vector<8x160xf32> -> vector<8x160xf32>
    %24 = vector.extract_strided_slice %23 {offsets = [0, 0], sizes = [8, 64], strides = [1, 1]} : vector<8x160xf32> to vector<8x64xf32>
    %25 = vector.extract_strided_slice %23 {offsets = [0, 64], sizes = [8, 64], strides = [1, 1]} : vector<8x160xf32> to vector<8x64xf32>
    %26 = vector.extract_strided_slice %23 {offsets = [0, 128], sizes = [8, 32], strides = [1, 1]} : vector<8x160xf32> to vector<8x32xf32>
    %c0_11 = arith.constant 0 : index
    %c0_12 = arith.constant 0 : index
    %27 = vector.load %arg4[%c0_11, %c0_12] : memref<8x64xf32, #tpu.memory_space<vmem>>, vector<8x64xf32>
    %28 = arith.mulf %24, %27 : vector<8x64xf32>
    %c0_13 = arith.constant 0 : index
    %c0_14 = arith.constant 0 : index
    %29 = vector.load %arg5[%c0_13, %c0_14] : memref<8x64xf32, #tpu.memory_space<vmem>>, vector<8x64xf32>
    %30 = arith.mulf %25, %29 : vector<8x64xf32>
    %31 = arith.addf %28, %30 : vector<8x64xf32>
    %32 = arith.truncf %31 : vector<8x64xf32> to vector<8x64xbf16>
    %33 = arith.truncf %26 : vector<8x32xf32> to vector<8x32xbf16>
    %34 = vector.extract_strided_slice %32 {offsets = [0, 0], sizes = [8, 8], strides = [1, 1]} : vector<8x64xbf16> to vector<8x8xbf16>
    %35 = vector.extract_strided_slice %32 {offsets = [0, 32], sizes = [8, 8], strides = [1, 1]} : vector<8x64xbf16> to vector<8x8xbf16>
    %36 = vector.extract_strided_slice %33 {offsets = [0, 0], sizes = [8, 8], strides = [1, 1]} : vector<8x32xbf16> to vector<8x8xbf16>
    %cst_15 = arith.constant dense<0.000000e+00> : vector<8x8xf32>
    %37 = tpu.matmul %34, %35, %cst_15 {dimension_numbers = #tpu.dot_dimension_numbers<[1], [1], [0], [0], [0, 0, 1, 0], [], []>} : vector<8x8xbf16>, vector<8x8xbf16>, vector<8x8xf32> -> vector<8x8xf32>
    %38 = arith.addf %37, %7 : vector<8x8xf32>
    %cst_16 = arith.constant dense<0xFF800000> : vector<8xf32>
    %39 = vector.multi_reduction <maximumf>, %38, %cst_16 [1] : vector<8x8xf32> to vector<8xf32>
    %40 = vector.shape_cast %39 : vector<8xf32> to vector<8x1xf32>
    %41 = vector.broadcast %40 : vector<8x1xf32> to vector<8x8xf32>
    %42 = arith.subf %38, %41 : vector<8x8xf32>
    %43 = math.exp %42 : vector<8x8xf32>
    %cst_17 = arith.constant dense<0.000000e+00> : vector<8xf32>
    %44 = vector.multi_reduction <add>, %43, %cst_17 [1] : vector<8x8xf32> to vector<8xf32>
    %45 = vector.shape_cast %44 : vector<8xf32> to vector<8x1xf32>
    %46 = tpu.reciprocal %45 {approx = true} : vector<8x1xf32> -> vector<8x1xf32>
    %47 = vector.broadcast %46 : vector<8x1xf32> to vector<8x8xf32>
    %48 = arith.mulf %43, %47 : vector<8x8xf32>
    %49 = arith.truncf %48 : vector<8x8xf32> to vector<8x8xbf16>
    %cst_18 = arith.constant dense<0.000000e+00> : vector<8x8xf32>
    %50 = tpu.matmul %49, %36, %cst_18 {dimension_numbers = #tpu.dot_dimension_numbers<[1], [0], [0], [1], [0, 0, 1, 1], [], []>} : vector<8x8xbf16>, vector<8x8xbf16>, vector<8x8xf32> -> vector<8x8xf32>
    %51 = vector.extract_strided_slice %32 {offsets = [0, 8], sizes = [8, 8], strides = [1, 1]} : vector<8x64xbf16> to vector<8x8xbf16>
    %52 = vector.extract_strided_slice %32 {offsets = [0, 40], sizes = [8, 8], strides = [1, 1]} : vector<8x64xbf16> to vector<8x8xbf16>
    %53 = vector.extract_strided_slice %33 {offsets = [0, 8], sizes = [8, 8], strides = [1, 1]} : vector<8x32xbf16> to vector<8x8xbf16>
    %cst_19 = arith.constant dense<0.000000e+00> : vector<8x8xf32>
    %54 = tpu.matmul %51, %52, %cst_19 {dimension_numbers = #tpu.dot_dimension_numbers<[1], [1], [0], [0], [0, 0, 1, 0], [], []>} : vector<8x8xbf16>, vector<8x8xbf16>, vector<8x8xf32> -> vector<8x8xf32>
    %55 = arith.addf %54, %7 : vector<8x8xf32>
    %cst_20 = arith.constant dense<0xFF800000> : vector<8xf32>
    %56 = vector.multi_reduction <maximumf>, %55, %cst_20 [1] : vector<8x8xf32> to vector<8xf32>
    %57 = vector.shape_cast %56 : vector<8xf32> to vector<8x1xf32>
    %58 = vector.broadcast %57 : vector<8x1xf32> to vector<8x8xf32>
    %59 = arith.subf %55, %58 : vector<8x8xf32>
    %60 = math.exp %59 : vector<8x8xf32>
    %cst_21 = arith.constant dense<0.000000e+00> : vector<8xf32>
    %61 = vector.multi_reduction <add>, %60, %cst_21 [1] : vector<8x8xf32> to vector<8xf32>
    %62 = vector.shape_cast %61 : vector<8xf32> to vector<8x1xf32>
    %63 = tpu.reciprocal %62 {approx = true} : vector<8x1xf32> -> vector<8x1xf32>
    %64 = vector.broadcast %63 : vector<8x1xf32> to vector<8x8xf32>
    %65 = arith.mulf %60, %64 : vector<8x8xf32>
    %66 = arith.truncf %65 : vector<8x8xf32> to vector<8x8xbf16>
    %cst_22 = arith.constant dense<0.000000e+00> : vector<8x8xf32>
    %67 = tpu.matmul %66, %53, %cst_22 {dimension_numbers = #tpu.dot_dimension_numbers<[1], [0], [0], [1], [0, 0, 1, 1], [], []>} : vector<8x8xbf16>, vector<8x8xbf16>, vector<8x8xf32> -> vector<8x8xf32>
    %68 = vector.extract_strided_slice %32 {offsets = [0, 16], sizes = [8, 8], strides = [1, 1]} : vector<8x64xbf16> to vector<8x8xbf16>
    %69 = vector.extract_strided_slice %32 {offsets = [0, 48], sizes = [8, 8], strides = [1, 1]} : vector<8x64xbf16> to vector<8x8xbf16>
    %70 = vector.extract_strided_slice %33 {offsets = [0, 16], sizes = [8, 8], strides = [1, 1]} : vector<8x32xbf16> to vector<8x8xbf16>
    %cst_23 = arith.constant dense<0.000000e+00> : vector<8x8xf32>
    %71 = tpu.matmul %68, %69, %cst_23 {dimension_numbers = #tpu.dot_dimension_numbers<[1], [1], [0], [0], [0, 0, 1, 0], [], []>} : vector<8x8xbf16>, vector<8x8xbf16>, vector<8x8xf32> -> vector<8x8xf32>
    %72 = arith.addf %71, %7 : vector<8x8xf32>
    %cst_24 = arith.constant dense<0xFF800000> : vector<8xf32>
    %73 = vector.multi_reduction <maximumf>, %72, %cst_24 [1] : vector<8x8xf32> to vector<8xf32>
    %74 = vector.shape_cast %73 : vector<8xf32> to vector<8x1xf32>
    %75 = vector.broadcast %74 : vector<8x1xf32> to vector<8x8xf32>
    %76 = arith.subf %72, %75 : vector<8x8xf32>
    %77 = math.exp %76 : vector<8x8xf32>
    %cst_25 = arith.constant dense<0.000000e+00> : vector<8xf32>
    %78 = vector.multi_reduction <add>, %77, %cst_25 [1] : vector<8x8xf32> to vector<8xf32>
    %79 = vector.shape_cast %78 : vector<8xf32> to vector<8x1xf32>
    %80 = tpu.reciprocal %79 {approx = true} : vector<8x1xf32> -> vector<8x1xf32>
    %81 = vector.broadcast %80 : vector<8x1xf32> to vector<8x8xf32>
    %82 = arith.mulf %77, %81 : vector<8x8xf32>
    %83 = arith.truncf %82 : vector<8x8xf32> to vector<8x8xbf16>
    %cst_26 = arith.constant dense<0.000000e+00> : vector<8x8xf32>
    %84 = tpu.matmul %83, %70, %cst_26 {dimension_numbers = #tpu.dot_dimension_numbers<[1], [0], [0], [1], [0, 0, 1, 1], [], []>} : vector<8x8xbf16>, vector<8x8xbf16>, vector<8x8xf32> -> vector<8x8xf32>
    %85 = vector.extract_strided_slice %32 {offsets = [0, 24], sizes = [8, 8], strides = [1, 1]} : vector<8x64xbf16> to vector<8x8xbf16>
    %86 = vector.extract_strided_slice %32 {offsets = [0, 56], sizes = [8, 8], strides = [1, 1]} : vector<8x64xbf16> to vector<8x8xbf16>
    %87 = vector.extract_strided_slice %33 {offsets = [0, 24], sizes = [8, 8], strides = [1, 1]} : vector<8x32xbf16> to vector<8x8xbf16>
    %cst_27 = arith.constant dense<0.000000e+00> : vector<8x8xf32>
    %88 = tpu.matmul %85, %86, %cst_27 {dimension_numbers = #tpu.dot_dimension_numbers<[1], [1], [0], [0], [0, 0, 1, 0], [], []>} : vector<8x8xbf16>, vector<8x8xbf16>, vector<8x8xf32> -> vector<8x8xf32>
    %89 = arith.addf %88, %7 : vector<8x8xf32>
    %cst_28 = arith.constant dense<0xFF800000> : vector<8xf32>
    %90 = vector.multi_reduction <maximumf>, %89, %cst_28 [1] : vector<8x8xf32> to vector<8xf32>
    %91 = vector.shape_cast %90 : vector<8xf32> to vector<8x1xf32>
    %92 = vector.broadcast %91 : vector<8x1xf32> to vector<8x8xf32>
    %93 = arith.subf %89, %92 : vector<8x8xf32>
    %94 = math.exp %93 : vector<8x8xf32>
    %cst_29 = arith.constant dense<0.000000e+00> : vector<8xf32>
    %95 = vector.multi_reduction <add>, %94, %cst_29 [1] : vector<8x8xf32> to vector<8xf32>
    %96 = vector.shape_cast %95 : vector<8xf32> to vector<8x1xf32>
    %97 = tpu.reciprocal %96 {approx = true} : vector<8x1xf32> -> vector<8x1xf32>
    %98 = vector.broadcast %97 : vector<8x1xf32> to vector<8x8xf32>
    %99 = arith.mulf %94, %98 : vector<8x8xf32>
    %100 = arith.truncf %99 : vector<8x8xf32> to vector<8x8xbf16>
    %cst_30 = arith.constant dense<0.000000e+00> : vector<8x8xf32>
    %101 = tpu.matmul %100, %87, %cst_30 {dimension_numbers = #tpu.dot_dimension_numbers<[1], [0], [0], [1], [0, 0, 1, 1], [], []>} : vector<8x8xbf16>, vector<8x8xbf16>, vector<8x8xf32> -> vector<8x8xf32>
    %102 = tpu.concatenate %50, %67, %84, %101 in 1 : vector<8x8xf32>, vector<8x8xf32>, vector<8x8xf32>, vector<8x8xf32> -> vector<8x32xf32>
    %103 = arith.truncf %102 : vector<8x32xf32> to vector<8x32xbf16>
    %c0_31 = arith.constant 0 : index
    %c0_32 = arith.constant 0 : index
    %104 = vector.load %arg6[%c0_31, %c0_32] : memref<32x32xbf16, #tpu.memory_space<vmem>>, vector<32x32xbf16>
    %cst_33 = arith.constant dense<0.000000e+00> : vector<8x32xf32>
    %105 = tpu.matmul %103, %104, %cst_33 {dimension_numbers = #tpu.dot_dimension_numbers<[1], [0], [0], [1], [0, 0, 1, 1], [], []>} : vector<8x32xbf16>, vector<32x32xbf16>, vector<8x32xf32> -> vector<8x32xf32>
    %106 = arith.addf %1, %105 : vector<8x32xf32>
    %107 = arith.mulf %106, %106 : vector<8x32xf32>
    %cst_34 = arith.constant dense<0.000000e+00> : vector<8xf32>
    %108 = vector.multi_reduction <add>, %107, %cst_34 [1] : vector<8x32xf32> to vector<8xf32>
    %109 = vector.shape_cast %108 : vector<8xf32> to vector<8x1xf32>
    %cst_35 = arith.constant 3.200000e+01 : f32
    %110 = vector.broadcast %cst_35 : f32 to vector<8x1xf32>
    %111 = arith.divf %109, %110 : vector<8x1xf32>
    %cst_36 = arith.constant 9.99999974E-6 : f32
    %112 = vector.broadcast %cst_36 : f32 to vector<8x1xf32>
    %113 = arith.addf %111, %112 : vector<8x1xf32>
    %114 = math.rsqrt %113 : vector<8x1xf32>
    %115 = vector.broadcast %114 : vector<8x1xf32> to vector<8x32xf32>
    %116 = arith.mulf %106, %115 : vector<8x32xf32>
    %c0_37 = arith.constant 0 : index
    %c0_38 = arith.constant 0 : index
    %117 = vector.load %arg7[%c0_37, %c0_38] : memref<1x32xf32, #tpu.memory_space<vmem>>, vector<1x32xf32>
    %118 = vector.broadcast %117 : vector<1x32xf32> to vector<8x32xf32>
    %119 = arith.mulf %116, %118 : vector<8x32xf32>
    %120 = arith.truncf %119 : vector<8x32xf32> to vector<8x32xbf16>
    %c0_39 = arith.constant 0 : index
    %c0_40 = arith.constant 0 : index
    %121 = vector.load %arg8[%c0_39, %c0_40] : memref<32x192xbf16, #tpu.memory_space<vmem>>, vector<32x192xbf16>
    %cst_41 = arith.constant dense<0.000000e+00> : vector<8x192xf32>
    %122 = tpu.matmul %120, %121, %cst_41 {dimension_numbers = #tpu.dot_dimension_numbers<[1], [0], [0], [1], [0, 0, 1, 1], [], []>} : vector<8x32xbf16>, vector<32x192xbf16>, vector<8x192xf32> -> vector<8x192xf32>
    %123 = vector.extract_strided_slice %122 {offsets = [0, 0], sizes = [8, 96], strides = [1, 1]} : vector<8x192xf32> to vector<8x96xf32>
    %124 = vector.extract_strided_slice %122 {offsets = [0, 96], sizes = [8, 96], strides = [1, 1]} : vector<8x192xf32> to vector<8x96xf32>
    %125 = arith.negf %123 : vector<8x96xf32>
    %126 = math.exp %125 : vector<8x96xf32>
    %cst_42 = arith.constant 1.000000e+00 : f32
    %127 = vector.broadcast %cst_42 : f32 to vector<8x96xf32>
    %128 = arith.addf %127, %126 : vector<8x96xf32>
    %129 = arith.divf %127, %128 : vector<8x96xf32>
    %130 = arith.mulf %123, %129 : vector<8x96xf32>
    %131 = arith.mulf %130, %124 : vector<8x96xf32>
    %132 = arith.truncf %131 : vector<8x96xf32> to vector<8x96xbf16>
    %c0_43 = arith.constant 0 : index
    %c0_44 = arith.constant 0 : index
    %133 = vector.load %arg9[%c0_43, %c0_44] : memref<96x32xbf16, #tpu.memory_space<vmem>>, vector<96x32xbf16>
    %cst_45 = arith.constant dense<0.000000e+00> : vector<8x32xf32>
    %134 = tpu.matmul %132, %133, %cst_45 {dimension_numbers = #tpu.dot_dimension_numbers<[1], [0], [0], [1], [0, 0, 1, 1], [], []>} : vector<8x96xbf16>, vector<96x32xbf16>, vector<8x32xf32> -> vector<8x32xf32>
    %135 = arith.addf %106, %134 : vector<8x32xf32>
    %c0_46 = arith.constant 0 : index
    %c0_47 = arith.constant 0 : index
    %c0_48 = arith.constant 0 : index
    %136 = vector.load %arg10[%c0_46, %c0_47, %c0_48] : memref<1x8x32xf32, #tpu.memory_space<vmem>>, vector<1x8x32xf32>
    %137 = vector.shape_cast %136 : vector<1x8x32xf32> to vector<8x32xf32>
    %138 = vector.shape_cast %135 : vector<8x32xf32> to vector<1x8x32xf32>
    tpu.vector_store %arg10[%c0_46, %c0_47, %c0_48], %138 {strides = array<i32>} : memref<1x8x32xf32, #tpu.memory_space<vmem>>, vector<1x8x32xf32>,
    return
  }
  func.func @transform_0(%arg0: i32) -> (i32, i32, i32) {
    %c0_i32 = arith.constant 0 : i32
    %c0_i32_0 = arith.constant 0 : i32
    %c0_i32_1 = arith.constant 0 : i32
    return %arg0, %c0_i32, %c0_i32_0 : i32, i32, i32
  }
  func.func @transform_1(%arg0: i32) -> (i32, i32) {
    %c0_i32 = arith.constant 0 : i32
    %c0_i32_0 = arith.constant 0 : i32
    %c0_i32_1 = arith.constant 0 : i32
    return %c0_i32, %c0_i32_0 : i32, i32
  }
  func.func @transform_2(%arg0: i32) -> (i32, i32) {
    %c0_i32 = arith.constant 0 : i32
    %c0_i32_0 = arith.constant 0 : i32
    %c0_i32_1 = arith.constant 0 : i32
    return %c0_i32, %c0_i32_0 : i32, i32
  }
  func.func @transform_3(%arg0: i32) -> (i32, i32) {
    %c0_i32 = arith.constant 0 : i32
    %c0_i32_0 = arith.constant 0 : i32
    %c0_i32_1 = arith.constant 0 : i32
    return %c0_i32, %c0_i32_0 : i32, i32
  }
  func.func @transform_4(%arg0: i32) -> (i32, i32) {
    %c0_i32 = arith.constant 0 : i32
    %c0_i32_0 = arith.constant 0 : i32
    %c0_i32_1 = arith.constant 0 : i32
    return %c0_i32, %c0_i32_0 : i32, i32
  }
  func.func @transform_5(%arg0: i32) -> (i32, i32) {
    %c0_i32 = arith.constant 0 : i32
    %c0_i32_0 = arith.constant 0 : i32
    %c0_i32_1 = arith.constant 0 : i32
    return %c0_i32, %c0_i32_0 : i32, i32
  }
  func.func @transform_6(%arg0: i32) -> (i32, i32) {
    %c0_i32 = arith.constant 0 : i32
    %c0_i32_0 = arith.constant 0 : i32
    %c0_i32_1 = arith.constant 0 : i32
    return %c0_i32, %c0_i32_0 : i32, i32
  }
  func.func @transform_7(%arg0: i32) -> (i32, i32) {
    %c0_i32 = arith.constant 0 : i32
    %c0_i32_0 = arith.constant 0 : i32
    %c0_i32_1 = arith.constant 0 : i32
    return %c0_i32, %c0_i32_0 : i32, i32
  }
  func.func @transform_8(%arg0: i32) -> (i32, i32) {
    %c0_i32 = arith.constant 0 : i32
    %c0_i32_0 = arith.constant 0 : i32
    %c0_i32_1 = arith.constant 0 : i32
    return %c0_i32, %c0_i32_0 : i32, i32
  }
  func.func @transform_9(%arg0: i32) -> (i32, i32, i32) {
    %c0_i32 = arith.constant 0 : i32
    %c0_i32_0 = arith.constant 0 : i32
    %c0_i32_1 = arith.constant 0 : i32
    return %arg0, %c0_i32, %c0_i32_0 : i32, i32, i32
  }
}

</mosaic_0001>

<llo_original>
// kernel: tpu_custom_call.1
$region0: #{tpu_custom_call.1}
  #allocation0 [shape = 'u32[]', space=smem, size = 0x4, offset = 0x4, fixed_abs, tag = 'smem constant byte address 0x4 - core index']
  #allocation1 [shape = 'u32[144,128]{1,0:T(1,128)}', space=vmem, size = 0x12000, scoped, tag = 'internal scratch']
  %s0 = inlined_call_operand.hbm [shape: f32[2,8,32], index: 0, kind: input, shape index: {}]
  %s1 = inlined_call_operand.vmem [shape: f32[1,32], index: 1, kind: input, shape index: {}]
  %s2 = inlined_call_operand.vmem [shape: bf16[32,160], index: 2, kind: input, shape index: {}]
  %s3 = inlined_call_operand.hbm [shape: f32[8,64], index: 3, kind: input, shape index: {}]
  %s4 = inlined_call_operand.hbm [shape: f32[8,64], index: 4, kind: input, shape index: {}]
  %s5 = inlined_call_operand.hbm [shape: bf16[32,32], index: 5, kind: input, shape index: {}]
  %s6 = inlined_call_operand.vmem [shape: f32[1,32], index: 6, kind: input, shape index: {}]
  %s7 = inlined_call_operand.vmem [shape: bf16[32,192], index: 7, kind: input, shape index: {}]
  %s8 = inlined_call_operand.vmem [shape: bf16[96,32], index: 8, kind: input, shape index: {}]
  %s9 = inlined_call_operand.hbm [shape: f32[2,8,32], index: 9, kind: output, shape index: {}]
  %s10 = sld [smem:[#allocation0]]
  $region85: #{tpu_custom_call.1} parent=0
    _
  %s12 = ssub.s32 1, %s10
  %s13 = scalar_select 0, %s12, %s10
  $region1: #{tpu_custom_call.1} parent=0
    #allocation2 [shape = 'u8[8192]{0}', space=vmem, size = 0x2000, scoped, tag = 'input window, operand 0']
    #allocation3 [shape = 's32[2]{0}', space=sflag, size = 0x8, scoped, tag = 'scoped memory for tpu_custom_call.1']
    #allocation4 [shape = 's32[2]{0}', space=sflag, size = 0x8, scoped, tag = 'scoped memory for tpu_custom_call.1']
    #allocation5 [shape = 'u8[4096]{0}', space=vmem, size = 0x1000, scoped, tag = 'input window, operand 3, single buffered']
    #allocation6 [shape = 's32[1]{0}', space=sflag, size = 0x4, scoped, tag = 'scoped memory for tpu_custom_call.1']
    #allocation7 [shape = 'u8[4096]{0}', space=vmem, size = 0x1000, scoped, tag = 'input window, operand 4, single buffered']
    #allocation8 [shape = 'u8[8192]{0}', space=vmem, size = 0x2000, scoped, tag = 'input window, operand 5, single buffered']
    #allocation9 [shape = 's32[1]{0}', space=sflag, size = 0x4, scoped, tag = 'scoped memory for tpu_custom_call.1']
    #allocation10 [shape = 'u8[8192]{0}', space=vmem, size = 0x2000, scoped, tag = 'output window, operand 0']
    %14 = vsyncpa [#allocation3], 0
    %s15 = scalar_lea.sflag [#allocation3], 1
    %16 = vsyncpa %s15, 0
    %17 = vsyncpa [#allocation6], 0
    %18 = vsyncpa [#allocation9], 0
    %19 = vsyncpa [#allocation4], 0
    %s20 = scalar_lea.sflag [#allocation4], 1
    %21 = vsyncpa %s20, 0
    loop: start=0, step=1, limit=4
    $region2: #{tpu_custom_call.1} parent=1 // loop_pre_header
      _
    $region3: #{tpu_custom_call.1} parent=1 // loop_header
      %s23 = sphi 0, %s27
      %p24 = scmp.ge.s32.totalorder %s23, 4
      %s33 = sphi 0, %s35
      %s36 = sphi 0, %s33
      %s37 = sphi 0, %s36
      %s53 = sphi 0, %s37
      %s57 = sphi 0, %s57
      %s59 = sphi 0, %s57
      %s60 = sphi 0, %s59
      %s74 = sphi 0, %s60
      %s78 = sphi 0, %s78
      %s80 = sphi 0, %s78
      %s81 = sphi 0, %s80
      %s95 = sphi 0, %s81
      %s99 = sphi 0, %s99
      %s101 = sphi 0, %s99
      %s102 = sphi 0, %s101
      %s116 = sphi 0, %s102
      %s120 = sphi 0, %s120
      %s122 = sphi 0, %s120
      %s123 = sphi 0, %s122
      %s137 = sphi 0, %s123
      %s141 = sphi 0, %s141
      %s143 = sphi 0, %s141
      %s144 = sphi 0, %s143
      %s158 = sphi 0, %s144
      %s162 = sphi 0, %s162
      %s164 = sphi 0, %s162
      %s165 = sphi 0, %s164
      %s179 = sphi 0, %s165
      %s183 = sphi 0, %s183
      %s185 = sphi 0, %s183
      %s186 = sphi 0, %s185
      %s200 = sphi 0, %s186
      %s204 = sphi 0, %s204
      %s206 = sphi 0, %s204
      %s207 = sphi 0, %s206
      %s221 = sphi 0, %s207
      %s227 = sphi 0, %s229
      %s230 = sphi 0, %s227
      %s231 = sphi 0, %s230
      %s247 = sphi 0, %s231
    $region4: #{tpu_custom_call.1} parent=1 // loop_header_branch
      %26 = sbr.rel (%p24) target = $region8
    $region5: #{tpu_custom_call.1} parent=1 // loop_body
      %s28 = ssub.s32 %s23, 1
      %s29 = ssub.s32 %s23, 2
      %s30 = sadd.s32 %s23, 1
      %s31 = ssub.s32 %s23, %s30
      %p32 = scmp.eq.s32.totalorder %s31, 0
      %s34 = sadd.s32 %s33, 1
      %s35 = scalar_select %p32, %s33, %s34
      %p38 = pneg %p32
      %p39 = scmp.eq.s32.totalorder %s23, 1
      %p40 = por %p38, %p39
      %p41 = scmp.ne.s32.totalorder %s33, %s36
      %p42 = scmp.eq.s32.totalorder %s23, 0
      %p43 = por %p41, %p42
      %p44 = scmp.ne.s32.totalorder %s33, %s36
      %p45 = scmp.eq.s32.totalorder %s28, 1
      %p46 = por %p44, %p45
      %p47 = scmp.ne.s32.totalorder %s36, %s37
      %p48 = scmp.eq.s32.totalorder %s28, 0
      %p49 = por %p47, %p48
      %p50 = scmp.ne.s32.totalorder %s36, %s37
      %p51 = scmp.eq.s32.totalorder %s29, 1
      %p52 = por %p50, %p51
      %p54 = scmp.ne.s32.totalorder %s37, %s53
      %p55 = scmp.eq.s32.totalorder %s29, 0
      %p56 = por %p54, %p55
      %s58 = sadd.s32 %s57, 1
      %p61 = scmp.eq.s32.totalorder %s23, 1
      %p62 = scmp.ne.s32.totalorder %s57, %s59
      %p63 = scmp.eq.s32.totalorder %s23, 0
      %p64 = por %p62, %p63
      %p65 = scmp.ne.s32.totalorder %s57, %s59
      %p66 = scmp.eq.s32.totalorder %s28, 1
      %p67 = por %p65, %p66
      %p68 = scmp.ne.s32.totalorder %s59, %s60
      %p69 = scmp.eq.s32.totalorder %s28, 0
      %p70 = por %p68, %p69
      %p71 = scmp.ne.s32.totalorder %s59, %s60
      %p72 = scmp.eq.s32.totalorder %s29, 1
      %p73 = por %p71, %p72
      %p75 = scmp.ne.s32.totalorder %s60, %s74
      %p76 = scmp.eq.s32.totalorder %s29, 0
      %p77 = por %p75, %p76
      %s79 = sadd.s32 %s78, 1
      %p82 = scmp.eq.s32.totalorder %s23, 1
      %p83 = scmp.ne.s32.totalorder %s78, %s80
      %p84 = scmp.eq.s32.totalorder %s23, 0
      %p85 = por %p83, %p84
      %p86 = scmp.ne.s32.totalorder %s78, %s80
      %p87 = scmp.eq.s32.totalorder %s28, 1
      %p88 = por %p86, %p87
      %p89 = scmp.ne.s32.totalorder %s80, %s81
      %p90 = scmp.eq.s32.totalorder %s28, 0
      %p91 = por %p89, %p90
      %p92 = scmp.ne.s32.totalorder %s80, %s81
      %p93 = scmp.eq.s32.totalorder %s29, 1
      %p94 = por %p92, %p93
      %p96 = scmp.ne.s32.totalorder %s81, %s95
      %p97 = scmp.eq.s32.totalorder %s29, 0
      %p98 = por %p96, %p97
      %s100 = sadd.s32 %s99, 1
      %p103 = scmp.eq.s32.totalorder %s23, 1
      %p104 = scmp.ne.s32.totalorder %s99, %s101
      %p105 = scmp.eq.s32.totalorder %s23, 0
      %p106 = por %p104, %p105
      %p107 = scmp.ne.s32.totalorder %s99, %s101
      %p108 = scmp.eq.s32.totalorder %s28, 1
      %p109 = por %p107, %p108
      %p110 = scmp.ne.s32.totalorder %s101, %s102
      %p111 = scmp.eq.s32.totalorder %s28, 0
      %p112 = por %p110, %p111
      %p113 = scmp.ne.s32.totalorder %s101, %s102
      %p114 = scmp.eq.s32.totalorder %s29, 1
      %p115 = por %p113, %p114
      %p117 = scmp.ne.s32.totalorder %s102, %s116
      %p118 = scmp.eq.s32.totalorder %s29, 0
      %p119 = por %p117, %p118
      %s121 = sadd.s32 %s120, 1
      %p124 = scmp.eq.s32.totalorder %s23, 1
      %p125 = scmp.ne.s32.totalorder %s120, %s122
      %p126 = scmp.eq.s32.totalorder %s23, 0
      %p127 = por %p125, %p126
      %p128 = scmp.ne.s32.totalorder %s120, %s122
      %p129 = scmp.eq.s32.totalorder %s28, 1
      %p130 = por %p128, %p129
      %p131 = scmp.ne.s32.totalorder %s122, %s123
      %p132 = scmp.eq.s32.totalorder %s28, 0
      %p133 = por %p131, %p132
      %p134 = scmp.ne.s32.totalorder %s122, %s123
      %p135 = scmp.eq.s32.totalorder %s29, 1
      %p136 = por %p134, %p135
      %p138 = scmp.ne.s32.totalorder %s123, %s137
      %p139 = scmp.eq.s32.totalorder %s29, 0
      %p140 = por %p138, %p139
      %s142 = sadd.s32 %s141, 1
      %p145 = scmp.eq.s32.totalorder %s23, 1
      %p146 = scmp.ne.s32.totalorder %s141, %s143
      %p147 = scmp.eq.s32.totalorder %s23, 0
      %p148 = por %p146, %p147
      %p149 = scmp.ne.s32.totalorder %s141, %s143
      %p150 = scmp.eq.s32.totalorder %s28, 1
      %p151 = por %p149, %p150
      %p152 = scmp.ne.s32.totalorder %s143, %s144
      %p153 = scmp.eq.s32.totalorder %s28, 0
      %p154 = por %p152, %p153
      %p155 = scmp.ne.s32.totalorder %s143, %s144
      %p156 = scmp.eq.s32.totalorder %s29, 1
      %p157 = por %p155, %p156
      %p159 = scmp.ne.s32.totalorder %s144, %s158
      %p160 = scmp.eq.s32.totalorder %s29, 0
      %p161 = por %p159, %p160
      %s163 = sadd.s32 %s162, 1
      %p166 = scmp.eq.s32.totalorder %s23, 1
      %p167 = scmp.ne.s32.totalorder %s162, %s164
      %p168 = scmp.eq.s32.totalorder %s23, 0
      %p169 = por %p167, %p168
      %p170 = scmp.ne.s32.totalorder %s162, %s164
      %p171 = scmp.eq.s32.totalorder %s28, 1
      %p172 = por %p170, %p171
      %p173 = scmp.ne.s32.totalorder %s164, %s165
      %p174 = scmp.eq.s32.totalorder %s28, 0
      %p175 = por %p173, %p174
      %p176 = scmp.ne.s32.totalorder %s164, %s165
      %p177 = scmp.eq.s32.totalorder %s29, 1
      %p178 = por %p176, %p177
      %p180 = scmp.ne.s32.totalorder %s165, %s179
      %p181 = scmp.eq.s32.totalorder %s29, 0
      %p182 = por %p180, %p181
      %s184 = sadd.s32 %s183, 1
      %p187 = scmp.eq.s32.totalorder %s23, 1
      %p188 = scmp.ne.s32.totalorder %s183, %s185
      %p189 = scmp.eq.s32.totalorder %s23, 0
      %p190 = por %p188, %p189
      %p191 = scmp.ne.s32.totalorder %s183, %s185
      %p192 = scmp.eq.s32.totalorder %s28, 1
      %p193 = por %p191, %p192
      %p194 = scmp.ne.s32.totalorder %s185, %s186
      %p195 = scmp.eq.s32.totalorder %s28, 0
      %p196 = por %p194, %p195
      %p197 = scmp.ne.s32.totalorder %s185, %s186
      %p198 = scmp.eq.s32.totalorder %s29, 1
      %p199 = por %p197, %p198
      %p201 = scmp.ne.s32.totalorder %s186, %s200
      %p202 = scmp.eq.s32.totalorder %s29, 0
      %p203 = por %p201, %p202
      %s205 = sadd.s32 %s204, 1
      %p208 = scmp.eq.s32.totalorder %s23, 1
      %p209 = scmp.ne.s32.totalorder %s204, %s206
      %p210 = scmp.eq.s32.totalorder %s23, 0
      %p211 = por %p209, %p210
      %p212 = scmp.ne.s32.totalorder %s204, %s206
      %p213 = scmp.eq.s32.totalorder %s28, 1
      %p214 = por %p212, %p213
      %p215 = scmp.ne.s32.totalorder %s206, %s207
      %p216 = scmp.eq.s32.totalorder %s28, 0
      %p217 = por %p215, %p216
      %p218 = scmp.ne.s32.totalorder %s206, %s207
      %p219 = scmp.eq.s32.totalorder %s29, 1
      %p220 = por %p218, %p219
      %p222 = scmp.ne.s32.totalorder %s207, %s221
      %p223 = scmp.eq.s32.totalorder %s29, 0
      %p224 = por %p222, %p223
      %s225 = ssub.s32 %s23, %s30
      %p226 = scmp.eq.s32.totalorder %s225, 0
      %s228 = sadd.s32 %s227, 1
      %s229 = scalar_select %p226, %s227, %s228
      %p232 = pneg %p226
      %p233 = scmp.eq.s32.totalorder %s23, 1
      %p234 = por %p232, %p233
      %p235 = scmp.ne.s32.totalorder %s227, %s230
      %p236 = scmp.eq.s32.totalorder %s23, 0
      %p237 = por %p235, %p236
      %p238 = scmp.ne.s32.totalorder %s227, %s230
      %p239 = scmp.eq.s32.totalorder %s28, 1
      %p240 = por %p238, %p239
      %p241 = scmp.ne.s32.totalorder %s230, %s231
      %p242 = scmp.eq.s32.totalorder %s28, 0
      %p243 = por %p241, %p242
      %p244 = scmp.ne.s32.totalorder %s230, %s231
      %p245 = scmp.eq.s32.totalorder %s29, 1
      %p246 = por %p244, %p245
      %p248 = scmp.ne.s32.totalorder %s231, %s247
      %p249 = scmp.eq.s32.totalorder %s29, 0
      %p250 = por %p248, %p249
      %p251 = scmp.le.s32.totalorder 1, %s23
      %p252 = scmp.lt.s32.totalorder %s23, 3
      %p253 = pnand %p251, %p252
      %p254 = pneg %p253
      // Predicated region
      $region9: #{tpu_custom_call.1} parent=5 // pred_check
        _
      $region10: #{tpu_custom_call.1} parent=5 // pred_check_branch
        %256 = sbr.rel (%p253) target = $region12
      $region11: #{tpu_custom_call.1} parent=5 // pred_region
        %s257 = ssub.s32 %s23, 1
        // Predicated region
        $region13: #{tpu_custom_call.1} parent=11 // pred_check
          %p258 = pneg %p70
        $region14: #{tpu_custom_call.1} parent=11 // pred_check_branch
          %260 = sbr.rel (%p258) target = $region16
        $region15: #{tpu_custom_call.1} parent=11 // pred_region
          _
        $region16: #{tpu_custom_call.1} parent=11 // pred_fallthru
          _
        // Predicated region
        $region17: #{tpu_custom_call.1} parent=11 // pred_check
          %p261 = pneg %p91
        $region18: #{tpu_custom_call.1} parent=11 // pred_check_branch
          %263 = sbr.rel (%p261) target = $region20
        $region19: #{tpu_custom_call.1} parent=11 // pred_region
          _
        $region20: #{tpu_custom_call.1} parent=11 // pred_fallthru
          _
        // Predicated region
        $region21: #{tpu_custom_call.1} parent=11 // pred_check
          %p264 = pneg %p112
        $region22: #{tpu_custom_call.1} parent=11 // pred_check_branch
          %266 = sbr.rel (%p264) target = $region24
        $region23: #{tpu_custom_call.1} parent=11 // pred_region
          %s268 = ssub.s32 128, 128
          %269 = vsyncadd [#allocation6], %s268
          %s271 = sshll.u32 [#allocation5], 4
          %s272 = int_to_ptr.vmem [resolvable:$true] %s271
          %274 = dma.hbm_to_vmem [thread:$0]  %s3, 128, %s272, [#allocation6]
        $region24: #{tpu_custom_call.1} parent=11 // pred_fallthru
          _
        // Predicated region
        $region25: #{tpu_custom_call.1} parent=11 // pred_check
          %p275 = pneg %p133
        $region26: #{tpu_custom_call.1} parent=11 // pred_check_branch
          %277 = sbr.rel (%p275) target = $region28
        $region27: #{tpu_custom_call.1} parent=11 // pred_region
          %s279 = ssub.s32 128, 128
          %280 = vsyncadd [#allocation6], %s279
          %s282 = sshll.u32 [#allocation7], 4
          %s283 = int_to_ptr.vmem [resolvable:$true] %s282
          %285 = dma.hbm_to_vmem [thread:$0]  %s4, 128, %s283, [#allocation6]
        $region28: #{tpu_custom_call.1} parent=11 // pred_fallthru
          _
        // Predicated region
        $region29: #{tpu_custom_call.1} parent=11 // pred_check
          %p286 = pneg %p154
        $region30: #{tpu_custom_call.1} parent=11 // pred_check_branch
          %288 = sbr.rel (%p286) target = $region32
        $region31: #{tpu_custom_call.1} parent=11 // pred_region
          %s290 = ssub.s32 256, 256
          %291 = vsyncadd [#allocation9], %s290
          %s292 = sshll.u32 [#allocation8], 4
          %s293 = int_to_ptr.vmem [resolvable:$true] %s292
          %298 = dma.hbm_to_vmem [thread:$0]  %s5, 256, %s293, [#allocation9], 64, 64, 4
        $region32: #{tpu_custom_call.1} parent=11 // pred_fallthru
          _
        // Predicated region
        $region33: #{tpu_custom_call.1} parent=11 // pred_check
          %p299 = pneg %p175
        $region34: #{tpu_custom_call.1} parent=11 // pred_check_branch
          %301 = sbr.rel (%p299) target = $region36
        $region35: #{tpu_custom_call.1} parent=11 // pred_region
          _
        $region36: #{tpu_custom_call.1} parent=11 // pred_fallthru
          _
        // Predicated region
        $region37: #{tpu_custom_call.1} parent=11 // pred_check
          %p302 = pneg %p196
        $region38: #{tpu_custom_call.1} parent=11 // pred_check_branch
          %304 = sbr.rel (%p302) target = $region40
        $region39: #{tpu_custom_call.1} parent=11 // pred_region
          _
        $region40: #{tpu_custom_call.1} parent=11 // pred_fallthru
          _
        // Predicated region
        $region41: #{tpu_custom_call.1} parent=11 // pred_check
          %p305 = pneg %p217
        $region42: #{tpu_custom_call.1} parent=11 // pred_check_branch
          %307 = sbr.rel (%p305) target = $region44
        $region43: #{tpu_custom_call.1} parent=11 // pred_region
          _
        $region44: #{tpu_custom_call.1} parent=11 // pred_fallthru
          _
      $region12: #{tpu_custom_call.1} parent=5 // pred_fallthru
        _
      %p308 = scmp.lt.s32.totalorder %s23, 2
      // Predicated region
      $region45: #{tpu_custom_call.1} parent=5 // pred_check
        %p309 = pneg %p308
      $region46: #{tpu_custom_call.1} parent=5 // pred_check_branch
        %311 = sbr.rel (%p309) target = $region48
      $region47: #{tpu_custom_call.1} parent=5 // pred_region
        // Predicated region
        $region49: #{tpu_custom_call.1} parent=47 // pred_check
          %p312 = pneg %p43
        $region50: #{tpu_custom_call.1} parent=47 // pred_check_branch
          %314 = sbr.rel (%p312) target = $region52
        $region51: #{tpu_custom_call.1} parent=47 // pred_region
          %s315 = sand.u32 %s33, 1
          %s316 = scalar_lea.sflag [#allocation3], %s315
          %s317 = sand.u32 %s33, 1
          %s318 = smul.addr %s317, 8
          %s319 = scalar_lea.vmem [#allocation2], %s318
          %s321 = ssub.s32 128, 128
          %322 = vsyncadd %s316, %s321
          %s323 = smul.addr %s23, 128
          %s324 = scalar_lea.hbm %s0, %s323
          %s326 = sshll.u32 %s319, 4
          %s327 = int_to_ptr.vmem [resolvable:$true] %s326
          %329 = dma.hbm_to_vmem [thread:$0]  %s324, 128, %s327, %s316
        $region52: #{tpu_custom_call.1} parent=47 // pred_fallthru
          _
      $region48: #{tpu_custom_call.1} parent=5 // pred_fallthru
        _
      %p330 = scmp.le.s32.totalorder 1, %s23
      %p331 = scmp.lt.s32.totalorder %s23, 3
      %p332 = pnand %p330, %p331
      %p333 = pneg %p332
      // Predicated region
      $region53: #{tpu_custom_call.1} parent=5 // pred_check
        _
      $region54: #{tpu_custom_call.1} parent=5 // pred_check_branch
        %335 = sbr.rel (%p332) target = $region56
      $region55: #{tpu_custom_call.1} parent=5 // pred_region
        %s336 = ssub.s32 %s23, 1
        %s337 = sand.u32 %s36, 1
        %s338 = scalar_lea.sflag [#allocation3], %s337
        %s339 = sand.u32 %s36, 1
        %s340 = smul.addr %s339, 8
        %s341 = scalar_lea.vmem [#allocation2], %s340
        // Predicated region
        $region57: #{tpu_custom_call.1} parent=55 // pred_check
          %p342 = pneg %p49
        $region58: #{tpu_custom_call.1} parent=55 // pred_check_branch
          %344 = sbr.rel (%p342) target = $region60
        $region59: #{tpu_custom_call.1} parent=55 // pred_region
          %345 = dma.done %s338, 128
        $region60: #{tpu_custom_call.1} parent=55 // pred_fallthru
          _
        // Predicated region
        $region61: #{tpu_custom_call.1} parent=55 // pred_check
          %p346 = pneg %p112
        $region62: #{tpu_custom_call.1} parent=55 // pred_check_branch
          %348 = sbr.rel (%p346) target = $region64
        $region63: #{tpu_custom_call.1} parent=55 // pred_region
          %349 = dma.done [#allocation6], 128
        $region64: #{tpu_custom_call.1} parent=55 // pred_fallthru
          _
        // Predicated region
        $region65: #{tpu_custom_call.1} parent=55 // pred_check
          %p350 = pneg %p133
        $region66: #{tpu_custom_call.1} parent=55 // pred_check_branch
          %352 = sbr.rel (%p350) target = $region68
        $region67: #{tpu_custom_call.1} parent=55 // pred_region
          %353 = dma.done [#allocation6], 128
        $region68: #{tpu_custom_call.1} parent=55 // pred_fallthru
          _
        // Predicated region
        $region69: #{tpu_custom_call.1} parent=55 // pred_check
          %p354 = pneg %p154
        $region70: #{tpu_custom_call.1} parent=55 // pred_check_branch
          %356 = sbr.rel (%p354) target = $region72
        $region71: #{tpu_custom_call.1} parent=55 // pred_region
          %357 = dma.done [#allocation9], 256
        $region72: #{tpu_custom_call.1} parent=55 // pred_fallthru
          _
        %s358 = sand.u32 %s36, 1
        %s359 = scalar_lea.sflag [#allocation3], %s358
        %s360 = sand.u32 %s36, 1
        %s361 = smul.addr %s360, 8
        %s362 = scalar_lea.vmem [#allocation2], %s361
        %p363 = pneg %p49
        %p364 = pneg %p46
        %p365 = pneg %p70
        %p366 = pneg %p67
        %p367 = pneg %p91
        %p368 = pneg %p88
        %p369 = pneg %p112
        %p370 = pneg %p109
        %p371 = pneg %p133
        %p372 = pneg %p130
        %p373 = pneg %p154
        %p374 = pneg %p151
        %p375 = pneg %p175
        %p376 = pneg %p172
        %p377 = pneg %p196
        %p378 = pneg %p193
        %p379 = pneg %p217
        %p380 = pneg %p214
        %p381 = pneg %p243
        %p382 = pneg %p240
        %s383 = sand.u32 %s230, 1
        %s384 = scalar_lea.sflag [#allocation4], %s383
        %s385 = sand.u32 %s230, 1
        %s386 = smul.addr %s385, 8
        %s387 = scalar_lea.vmem [#allocation10], %s386
        %v389 = vld [vmem:[%s341] sm:$0xff]
        %v390 = vlaneseq
        %v391 = vshrl.u32 %v390, 7
        %v392 = vlaneseq
        %v393 = vand.u32 %v392, 127
        %vm394 = vcmp.ge.s32.totalorder %v391, %v393
        %v395 = vsel %vm394, 0.0, -1e+30
        %v396 = vmul.f32 %v389, %v389
        %vm397 = vcmask 261120
        %v398 = vsel %vm397, %v396, 0.0
        %399 = vadd.xlane.f32.xlu0 %v398
        %v400 = vpop.xlane.xlu0 %399
        %v401 = vrcp.pop 32.0
        %v402 = vmul.f32 %v400, %v401
        %v403 = vadd.f32 %v402, 1e-05
        %v404 = vrsqrt.pop %v403
        %v405 = vmul.f32 %v389, %v404
        %v406 = vld [vmem:[%s1] sm:$0x1]
        %v408 = vlaneseq
        %v409 = vshrl.u32 %v408, 7
        %v410 = vsub.s32 0, %v409
        %v411 = vrot.slane %v406, %v410
        %v413 = vmul.f32 %v405, %v411
        %v414 = vpack.c.bf16 %v413, %v413
        %v415 = vld [vmem:[%s2] sm:$0xff]
        %v416 = vld [vmem:[%s2 + $0x8] sm:$0xff]
        %v417 = vld [vmem:[%s2 + $0x10] sm:$0xff]
        %v418 = vld [vmem:[%s2 + $0x18] sm:$0xff]
        %v423 = vunpack.c.l.b16 %v415
        %v424 = vunpack.c.h.b16 %v415
        %v425 = vunpack.c.l.b16 %v416
        %v426 = vunpack.c.h.b16 %v416
        %v427 = vunpack.c.l.b16 %v417
        %v428 = vunpack.c.h.b16 %v417
        %v429 = vunpack.c.l.b16 %v418
        %v430 = vunpack.c.h.b16 %v418
        %v431 = vpack.c.b16 %v425, %v423
        %v432 = vpack.c.b16 %v426, %v424
        %v433 = vpack.c.b16 %v429, %v427
        %v434 = vpack.c.b16 %v430, %v428
        %v440 = vsel %vm397, %v414, 0
        %442 = vmatprep.subr.bf16.mxu0 0
        %443 = vmatpush1.bf16.msra.mxu0 0
        %444 = vmatprep.subr.bf16.mxu0 0
        %445 = vmatpush1.bf16.msra.mxu0 0
        %446 = vmatprep.subr.bf16.mxu0 0
        %447 = vmatpush1.bf16.msra.mxu0 0
        %448 = vmatprep.subr.bf16.mxu0 0
        %449 = vmatpush1.bf16.msra.mxu0 0
        %450 = vmatprep.subr.bf16.mxu0 0
        %451 = vmatpush1.bf16.msra.mxu0 0
        %452 = vmatprep.subr.bf16.mxu0 0
        %453 = vmatpush1.bf16.msra.mxu0 0
        %454 = vmatprep.subr.bf16.mxu0 %v434
        %455 = vmatpush1.bf16.msra.mxu0 %v433
        %456 = vmatprep.subr.bf16.mxu0 %v432
        %457 = vmatpush1.bf16.msra.mxu0 %v431
        %458 = vmatprep.subr.bf16.mxu0 0
        %459 = vmatpush2.bf16.msra.mxu0 0
        %460 = vmatprep.subr.bf16.mxu0 0
        %461 = vmatpush2.bf16.msra.mxu0 0
        %462 = vmatprep.subr.bf16.mxu0 0
        %463 = vmatpush2.bf16.msra.mxu0 0
        %464 = vmatprep.subr.bf16.mxu0 0
        %465 = vmatpush2.bf16.msra.mxu0 0
        %466 = vmatprep.subr.bf16.mxu0 0
        %467 = vmatpush2.bf16.msra.mxu0 0
        %468 = vmatprep.subr.bf16.mxu0 0
        %469 = vmatpush2.bf16.msra.mxu0 0
        %470 = vmatprep.subr.bf16.mxu0 0
        %471 = vmatpush2.bf16.msra.mxu0 0
        %472 = vmatprep.subr.bf16.mxu0 0
        %473 = vmatpush2.bf16.msra.mxu0 0
        %474 = vmatprep.mubr.bf16.mxu0 0
        %475 = vmatmul.mubr.bf16.gmra.mxu0 %v440
        %v476 = vpop.f32.mrf.mxu0
        %v477 = vadd.f32 0.0, %v476
        %v478 = vpop.f32.mrf.mxu0
        %v479 = vadd.f32 0.0, %v478
        %v480 = vpop.f32.mrf.mxu0
        %v481 = vpop.f32.mrf.mxu0
        %482 = vdwg.mxu0
        %v483 = vld [vmem:[#allocation5] sm:$0xff]
        %v484 = vmul.f32 %v477, %v483
        %v485 = vld [vmem:[#allocation7] sm:$0xff]
        %487 = vrot.lane.b32.xlu0 %v485, 64
        %v488 = vpop.permute.xlu0 %487
        %v490 = vmul.f32 %v477, %v488
        %492 = vrot.lane.b32.xlu0 %v490, 64
        %v493 = vpop.permute.xlu0 %492
        %v495 = vadd.f32 %v484, %v493
        %v496 = vpack.c.bf16 %v495, %v495
        %v497 = vpack.c.bf16 %v479, %v479
        %499 = vrot.lane.b32.xlu0 %v496, 96
        %v500 = vpop.permute.xlu0 %499
        %vm501 = vcmask 64512
        %v503 = vsel %vm501, %v496, 0
        %v506 = vsel %vm501, %v500, 0
        %508 = vmatprep.subr.bf16.mxu0 0
        %509 = vmatpush1.bf16.xpose.msra.mxu0 0
        %510 = vmatprep.subr.bf16.mxu0 0
        %511 = vmatpush1.bf16.xpose.msra.mxu0 0
        %512 = vmatprep.subr.bf16.mxu0 0
        %513 = vmatpush1.bf16.xpose.msra.mxu0 0
        %514 = vmatprep.subr.bf16.mxu0 0
        %515 = vmatpush1.bf16.xpose.msra.mxu0 0
        %516 = vmatprep.subr.bf16.mxu0 0
        %517 = vmatpush1.bf16.xpose.msra.mxu0 0
        %518 = vmatprep.subr.bf16.mxu0 0
        %519 = vmatpush1.bf16.xpose.msra.mxu0 0
        %520 = vmatprep.subr.bf16.mxu0 0
        %521 = vmatpush1.bf16.xpose.msra.mxu0 0
        %522 = vmatprep.subr.bf16.mxu0 0
        %523 = vmatpush1.bf16.xpose.msra.mxu0 %v506
        %524 = vmatprep.subr.bf16.mxu0 0
        %525 = vmatpush2.bf16.xpose.msra.mxu0 0
        %526 = vmatprep.subr.bf16.mxu0 0
        %527 = vmatpush2.bf16.xpose.msra.mxu0 0
        %528 = vmatprep.subr.bf16.mxu0 0
        %529 = vmatpush2.bf16.xpose.msra.mxu0 0
        %530 = vmatprep.subr.bf16.mxu0 0
        %531 = vmatpush2.bf16.xpose.msra.mxu0 0
        %532 = vmatprep.subr.bf16.mxu0 0
        %533 = vmatpush2.bf16.xpose.msra.mxu0 0
        %534 = vmatprep.subr.bf16.mxu0 0
        %535 = vmatpush2.bf16.xpose.msra.mxu0 0
        %536 = vmatprep.subr.bf16.mxu0 0
        %537 = vmatpush2.bf16.xpose.msra.mxu0 0
        %538 = vmatprep.subr.bf16.mxu0 0
        %539 = vmatpush2.bf16.xpose.msra.mxu0 0
        %540 = vmatprep.mubr.bf16.mxu0 0
        %541 = vmatmul.mubr.bf16.gmra.mxu0 %v503
        %v542 = vpop.f32.mrf.mxu0
        %v543 = vadd.f32 %v395, %v542
        %v544 = vpop.f32.mrf.mxu0
        %v545 = vpop.f32.mrf.mxu0
        %v546 = vpop.f32.mrf.mxu0
        %547 = vdwg.mxu0
        %v548 = vsel %vm501, %v543, -inf
        %549 = vmax.xlane.f32.xlu0 %v548
        %v550 = vpop.xlane.xlu0 %549
        %v551 = vsub.f32 %v543, %v550
        %v552 = vmul.f32 %v551, 1.442695
        %v553 = vpow.pop %v552
        %v554 = vsel %vm501, %v553, 0.0
        %555 = vadd.xlane.f32.xlu0 %v554
        %v556 = vpop.xlane.xlu0 %555
        %v557 = vrcp.pop %v556
        %v558 = vmul.f32 %v553, %v557
        %v559 = vpack.c.bf16 %v558, %v558
        %v561 = vsel %vm501, %v559, 0
        %vm563 = vcmask 1043456
        %v565 = vsel %vm563, %v497, 0
        %567 = vmatprep.subr.bf16.mxu0 0
        %568 = vmatpush1.bf16.msra.mxu0 0
        %569 = vmatprep.subr.bf16.mxu0 0
        %570 = vmatpush1.bf16.msra.mxu0 0
        %571 = vmatprep.subr.bf16.mxu0 0
        %572 = vmatpush1.bf16.msra.mxu0 0
        %573 = vmatprep.subr.bf16.mxu0 0
        %574 = vmatpush1.bf16.msra.mxu0 0
        %575 = vmatprep.subr.bf16.mxu0 0
        %576 = vmatpush1.bf16.msra.mxu0 0
        %577 = vmatprep.subr.bf16.mxu0 0
        %578 = vmatpush1.bf16.msra.mxu0 0
        %579 = vmatprep.subr.bf16.mxu0 0
        %580 = vmatpush1.bf16.msra.mxu0 0
        %581 = vmatprep.subr.bf16.mxu0 0
        %582 = vmatpush1.bf16.msra.mxu0 %v565
        %583 = vmatprep.subr.bf16.mxu0 0
        %584 = vmatpush2.bf16.msra.mxu0 0
        %585 = vmatprep.subr.bf16.mxu0 0
        %586 = vmatpush2.bf16.msra.mxu0 0
        %587 = vmatprep.subr.bf16.mxu0 0
        %588 = vmatpush2.bf16.msra.mxu0 0
        %589 = vmatprep.subr.bf16.mxu0 0
        %590 = vmatpush2.bf16.msra.mxu0 0
        %591 = vmatprep.subr.bf16.mxu0 0
        %592 = vmatpush2.bf16.msra.mxu0 0
        %593 = vmatprep.subr.bf16.mxu0 0
        %594 = vmatpush2.bf16.msra.mxu0 0
        %595 = vmatprep.subr.bf16.mxu0 0
        %596 = vmatpush2.bf16.msra.mxu0 0
        %597 = vmatprep.subr.bf16.mxu0 0
        %598 = vmatpush2.bf16.msra.mxu0 0
        %599 = vmatprep.mubr.bf16.mxu0 0
        %600 = vmatmul.mubr.bf16.gmra.mxu0 %v561
        %v601 = vpop.f32.mrf.mxu0
        %v602 = vadd.f32 0.0, %v601
        %v603 = vpop.f32.mrf.mxu0
        %v604 = vpop.f32.mrf.mxu0
        %v605 = vpop.f32.mrf.mxu0
        %606 = vdwg.mxu0
        %607 = vrot.lane.b32.xlu0 %v496, 120
        %v608 = vpop.permute.xlu0 %607
        %609 = vrot.lane.b32.xlu0 %v496, 88
        %v610 = vpop.permute.xlu0 %609
        %v612 = vsel %vm501, %v608, 0
        %v615 = vsel %vm501, %v610, 0
        %617 = vmatprep.subr.bf16.mxu0 0
        %618 = vmatpush1.bf16.xpose.msra.mxu0 0
        %619 = vmatprep.subr.bf16.mxu0 0
        %620 = vmatpush1.bf16.xpose.msra.mxu0 0
        %621 = vmatprep.subr.bf16.mxu0 0
        %622 = vmatpush1.bf16.xpose.msra.mxu0 0
        %623 = vmatprep.subr.bf16.mxu0 0
        %624 = vmatpush1.bf16.xpose.msra.mxu0 0
        %625 = vmatprep.subr.bf16.mxu0 0
        %626 = vmatpush1.bf16.xpose.msra.mxu0 0
        %627 = vmatprep.subr.bf16.mxu0 0
        %628 = vmatpush1.bf16.xpose.msra.mxu0 0
        %629 = vmatprep.subr.bf16.mxu0 0
        %630 = vmatpush1.bf16.xpose.msra.mxu0 0
        %631 = vmatprep.subr.bf16.mxu0 0
        %632 = vmatpush1.bf16.xpose.msra.mxu0 %v615
        %633 = vmatprep.subr.bf16.mxu0 0
        %634 = vmatpush2.bf16.xpose.msra.mxu0 0
        %635 = vmatprep.subr.bf16.mxu0 0
        %636 = vmatpush2.bf16.xpose.msra.mxu0 0
        %637 = vmatprep.subr.bf16.mxu0 0
        %638 = vmatpush2.bf16.xpose.msra.mxu0 0
        %639 = vmatprep.subr.bf16.mxu0 0
        %640 = vmatpush2.bf16.xpose.msra.mxu0 0
        %641 = vmatprep.subr.bf16.mxu0 0
        %642 = vmatpush2.bf16.xpose.msra.mxu0 0
        %643 = vmatprep.subr.bf16.mxu0 0
        %644 = vmatpush2.bf16.xpose.msra.mxu0 0
        %645 = vmatprep.subr.bf16.mxu0 0
        %646 = vmatpush2.bf16.xpose.msra.mxu0 0
        %647 = vmatprep.subr.bf16.mxu0 0
        %648 = vmatpush2.bf16.xpose.msra.mxu0 0
        %649 = vmatprep.mubr.bf16.mxu0 0
        %650 = vmatmul.mubr.bf16.gmra.mxu0 %v612
        %v651 = vpop.f32.mrf.mxu0
        %v652 = vadd.f32 %v395, %v651
        %v653 = vpop.f32.mrf.mxu0
        %v654 = vpop.f32.mrf.mxu0
        %v655 = vpop.f32.mrf.mxu0
        %656 = vdwg.mxu0
        %v657 = vsel %vm501, %v652, -inf
        %658 = vmax.xlane.f32.xlu0 %v657
        %v659 = vpop.xlane.xlu0 %658
        %v660 = vsub.f32 %v652, %v659
        %v661 = vmul.f32 %v660, 1.442695
        %v662 = vpow.pop %v661
        %v663 = vsel %vm501, %v662, 0.0
        %664 = vadd.xlane.f32.xlu0 %v663
        %v665 = vpop.xlane.xlu0 %664
        %v666 = vrcp.pop %v665
        %v667 = vmul.f32 %v662, %v666
        %v668 = vpack.c.bf16 %v667, %v667
        %670 = vrot.lane.b32.xlu0 %v497, 120
        %v671 = vpop.permute.xlu0 %670
        %v673 = vsel %vm501, %v668, 0
        %v676 = vsel %vm563, %v671, 0
        %678 = vmatprep.subr.bf16.mxu0 0
        %679 = vmatpush1.bf16.msra.mxu0 0
        %680 = vmatprep.subr.bf16.mxu0 0
        %681 = vmatpush1.bf16.msra.mxu0 0
        %682 = vmatprep.subr.bf16.mxu0 0
        %683 = vmatpush1.bf16.msra.mxu0 0
        %684 = vmatprep.subr.bf16.mxu0 0
        %685 = vmatpush1.bf16.msra.mxu0 0
        %686 = vmatprep.subr.bf16.mxu0 0
        %687 = vmatpush1.bf16.msra.mxu0 0
        %688 = vmatprep.subr.bf16.mxu0 0
        %689 = vmatpush1.bf16.msra.mxu0 0
        %690 = vmatprep.subr.bf16.mxu0 0
        %691 = vmatpush1.bf16.msra.mxu0 0
        %692 = vmatprep.subr.bf16.mxu0 0
        %693 = vmatpush1.bf16.msra.mxu0 %v676
        %694 = vmatprep.subr.bf16.mxu0 0
        %695 = vmatpush2.bf16.msra.mxu0 0
        %696 = vmatprep.subr.bf16.mxu0 0
        %697 = vmatpush2.bf16.msra.mxu0 0
        %698 = vmatprep.subr.bf16.mxu0 0
        %699 = vmatpush2.bf16.msra.mxu0 0
        %700 = vmatprep.subr.bf16.mxu0 0
        %701 = vmatpush2.bf16.msra.mxu0 0
        %702 = vmatprep.subr.bf16.mxu0 0
        %703 = vmatpush2.bf16.msra.mxu0 0
        %704 = vmatprep.subr.bf16.mxu0 0
        %705 = vmatpush2.bf16.msra.mxu0 0
        %706 = vmatprep.subr.bf16.mxu0 0
        %707 = vmatpush2.bf16.msra.mxu0 0
        %708 = vmatprep.subr.bf16.mxu0 0
        %709 = vmatpush2.bf16.msra.mxu0 0
        %710 = vmatprep.mubr.bf16.mxu0 0
        %711 = vmatmul.mubr.bf16.gmra.mxu0 %v673
        %v712 = vpop.f32.mrf.mxu0
        %v713 = vadd.f32 0.0, %v712
        %v714 = vpop.f32.mrf.mxu0
        %v715 = vpop.f32.mrf.mxu0
        %v716 = vpop.f32.mrf.mxu0
        %717 = vdwg.mxu0
        %718 = vrot.lane.b32.xlu0 %v496, 112
        %v719 = vpop.permute.xlu0 %718
        %720 = vrot.lane.b32.xlu0 %v496, 80
        %v721 = vpop.permute.xlu0 %720
        %v723 = vsel %vm501, %v719, 0
        %v726 = vsel %vm501, %v721, 0
        %728 = vmatprep.subr.bf16.mxu0 0
        %729 = vmatpush1.bf16.xpose.msra.mxu0 0
        %730 = vmatprep.subr.bf16.mxu0 0
        %731 = vmatpush1.bf16.xpose.msra.mxu0 0
        %732 = vmatprep.subr.bf16.mxu0 0
        %733 = vmatpush1.bf16.xpose.msra.mxu0 0
        %734 = vmatprep.subr.bf16.mxu0 0
        %735 = vmatpush1.bf16.xpose.msra.mxu0 0
        %736 = vmatprep.subr.bf16.mxu0 0
        %737 = vmatpush1.bf16.xpose.msra.mxu0 0
        %738 = vmatprep.subr.bf16.mxu0 0
        %739 = vmatpush1.bf16.xpose.msra.mxu0 0
        %740 = vmatprep.subr.bf16.mxu0 0
        %741 = vmatpush1.bf16.xpose.msra.mxu0 0
        %742 = vmatprep.subr.bf16.mxu0 0
        %743 = vmatpush1.bf16.xpose.msra.mxu0 %v726
        %744 = vmatprep.subr.bf16.mxu0 0
        %745 = vmatpush2.bf16.xpose.msra.mxu0 0
        %746 = vmatprep.subr.bf16.mxu0 0
        %747 = vmatpush2.bf16.xpose.msra.mxu0 0
        %748 = vmatprep.subr.bf16.mxu0 0
        %749 = vmatpush2.bf16.xpose.msra.mxu0 0
        %750 = vmatprep.subr.bf16.mxu0 0
        %751 = vmatpush2.bf16.xpose.msra.mxu0 0
        %752 = vmatprep.subr.bf16.mxu0 0
        %753 = vmatpush2.bf16.xpose.msra.mxu0 0
        %754 = vmatprep.subr.bf16.mxu0 0
        %755 = vmatpush2.bf16.xpose.msra.mxu0 0
        %756 = vmatprep.subr.bf16.mxu0 0
        %757 = vmatpush2.bf16.xpose.msra.mxu0 0
        %758 = vmatprep.subr.bf16.mxu0 0
        %759 = vmatpush2.bf16.xpose.msra.mxu0 0
        %760 = vmatprep.mubr.bf16.mxu0 0
        %761 = vmatmul.mubr.bf16.gmra.mxu0 %v723
        %v762 = vpop.f32.mrf.mxu0
        %v763 = vadd.f32 %v395, %v762
        %v764 = vpop.f32.mrf.mxu0
        %v765 = vpop.f32.mrf.mxu0
        %v766 = vpop.f32.mrf.mxu0
        %767 = vdwg.mxu0
        %v768 = vsel %vm501, %v763, -inf
        %769 = vmax.xlane.f32.xlu0 %v768
        %v770 = vpop.xlane.xlu0 %769
        %v771 = vsub.f32 %v763, %v770
        %v772 = vmul.f32 %v771, 1.442695
        %v773 = vpow.pop %v772
        %v774 = vsel %vm501, %v773, 0.0
        %775 = vadd.xlane.f32.xlu0 %v774
        %v776 = vpop.xlane.xlu0 %775
        %v777 = vrcp.pop %v776
        %v778 = vmul.f32 %v773, %v777
        %v779 = vpack.c.bf16 %v778, %v778
        %780 = vrot.lane.b32.xlu0 %v497, 112
        %v781 = vpop.permute.xlu0 %780
        %v783 = vsel %vm501, %v779, 0
        %v786 = vsel %vm563, %v781, 0
        %788 = vmatprep.subr.bf16.mxu0 0
        %789 = vmatpush1.bf16.msra.mxu0 0
        %790 = vmatprep.subr.bf16.mxu0 0
        %791 = vmatpush1.bf16.msra.mxu0 0
        %792 = vmatprep.subr.bf16.mxu0 0
        %793 = vmatpush1.bf16.msra.mxu0 0
        %794 = vmatprep.subr.bf16.mxu0 0
        %795 = vmatpush1.bf16.msra.mxu0 0
        %796 = vmatprep.subr.bf16.mxu0 0
        %797 = vmatpush1.bf16.msra.mxu0 0
        %798 = vmatprep.subr.bf16.mxu0 0
        %799 = vmatpush1.bf16.msra.mxu0 0
        %800 = vmatprep.subr.bf16.mxu0 0
        %801 = vmatpush1.bf16.msra.mxu0 0
        %802 = vmatprep.subr.bf16.mxu0 0
        %803 = vmatpush1.bf16.msra.mxu0 %v786
        %804 = vmatprep.subr.bf16.mxu0 0
        %805 = vmatpush2.bf16.msra.mxu0 0
        %806 = vmatprep.subr.bf16.mxu0 0
        %807 = vmatpush2.bf16.msra.mxu0 0
        %808 = vmatprep.subr.bf16.mxu0 0
        %809 = vmatpush2.bf16.msra.mxu0 0
        %810 = vmatprep.subr.bf16.mxu0 0
        %811 = vmatpush2.bf16.msra.mxu0 0
        %812 = vmatprep.subr.bf16.mxu0 0
        %813 = vmatpush2.bf16.msra.mxu0 0
        %814 = vmatprep.subr.bf16.mxu0 0
        %815 = vmatpush2.bf16.msra.mxu0 0
        %816 = vmatprep.subr.bf16.mxu0 0
        %817 = vmatpush2.bf16.msra.mxu0 0
        %818 = vmatprep.subr.bf16.mxu0 0
        %819 = vmatpush2.bf16.msra.mxu0 0
        %820 = vmatprep.mubr.bf16.mxu0 0
        %821 = vmatmul.mubr.bf16.gmra.mxu0 %v783
        %v822 = vpop.f32.mrf.mxu0
        %v823 = vadd.f32 0.0, %v822
        %v824 = vpop.f32.mrf.mxu0
        %v825 = vpop.f32.mrf.mxu0
        %v826 = vpop.f32.mrf.mxu0
        %827 = vdwg.mxu0
        %828 = vrot.lane.b32.xlu0 %v496, 104
        %v829 = vpop.permute.xlu0 %828
        %830 = vrot.lane.b32.xlu0 %v496, 72
        %v831 = vpop.permute.xlu0 %830
        %v833 = vsel %vm501, %v829, 0
        %v836 = vsel %vm501, %v831, 0
        %838 = vmatprep.subr.bf16.mxu0 0
        %839 = vmatpush1.bf16.xpose.msra.mxu0 0
        %840 = vmatprep.subr.bf16.mxu0 0
        %841 = vmatpush1.bf16.xpose.msra.mxu0 0
        %842 = vmatprep.subr.bf16.mxu0 0
        %843 = vmatpush1.bf16.xpose.msra.mxu0 0
        %844 = vmatprep.subr.bf16.mxu0 0
        %845 = vmatpush1.bf16.xpose.msra.mxu0 0
        %846 = vmatprep.subr.bf16.mxu0 0
        %847 = vmatpush1.bf16.xpose.msra.mxu0 0
        %848 = vmatprep.subr.bf16.mxu0 0
        %849 = vmatpush1.bf16.xpose.msra.mxu0 0
        %850 = vmatprep.subr.bf16.mxu0 0
        %851 = vmatpush1.bf16.xpose.msra.mxu0 0
        %852 = vmatprep.subr.bf16.mxu0 0
        %853 = vmatpush1.bf16.xpose.msra.mxu0 %v836
        %854 = vmatprep.subr.bf16.mxu0 0
        %855 = vmatpush2.bf16.xpose.msra.mxu0 0
        %856 = vmatprep.subr.bf16.mxu0 0
        %857 = vmatpush2.bf16.xpose.msra.mxu0 0
        %858 = vmatprep.subr.bf16.mxu0 0
        %859 = vmatpush2.bf16.xpose.msra.mxu0 0
        %860 = vmatprep.subr.bf16.mxu0 0
        %861 = vmatpush2.bf16.xpose.msra.mxu0 0
        %862 = vmatprep.subr.bf16.mxu0 0
        %863 = vmatpush2.bf16.xpose.msra.mxu0 0
        %864 = vmatprep.subr.bf16.mxu0 0
        %865 = vmatpush2.bf16.xpose.msra.mxu0 0
        %866 = vmatprep.subr.bf16.mxu0 0
        %867 = vmatpush2.bf16.xpose.msra.mxu0 0
        %868 = vmatprep.subr.bf16.mxu0 0
        %869 = vmatpush2.bf16.xpose.msra.mxu0 0
        %870 = vmatprep.mubr.bf16.mxu0 0
        %871 = vmatmul.mubr.bf16.gmra.mxu0 %v833
        %v872 = vpop.f32.mrf.mxu0
        %v873 = vadd.f32 %v395, %v872
        %v874 = vpop.f32.mrf.mxu0
        %v875 = vpop.f32.mrf.mxu0
        %v876 = vpop.f32.mrf.mxu0
        %877 = vdwg.mxu0
        %v878 = vsel %vm501, %v873, -inf
        %879 = vmax.xlane.f32.xlu0 %v878
        %v880 = vpop.xlane.xlu0 %879
        %v881 = vsub.f32 %v873, %v880
        %v882 = vmul.f32 %v881, 1.442695
        %v883 = vpow.pop %v882
        %v884 = vsel %vm501, %v883, 0.0
        %885 = vadd.xlane.f32.xlu0 %v884
        %v886 = vpop.xlane.xlu0 %885
        %v887 = vrcp.pop %v886
        %v888 = vmul.f32 %v883, %v887
        %v889 = vpack.c.bf16 %v888, %v888
        %890 = vrot.lane.b32.xlu0 %v497, 104
        %v891 = vpop.permute.xlu0 %890
        %v893 = vsel %vm501, %v889, 0
        %v896 = vsel %vm563, %v891, 0
        %898 = vmatprep.subr.bf16.mxu0 0
        %899 = vmatpush1.bf16.msra.mxu0 0
        %900 = vmatprep.subr.bf16.mxu0 0
        %901 = vmatpush1.bf16.msra.mxu0 0
        %902 = vmatprep.subr.bf16.mxu0 0
        %903 = vmatpush1.bf16.msra.mxu0 0
        %904 = vmatprep.subr.bf16.mxu0 0
        %905 = vmatpush1.bf16.msra.mxu0 0
        %906 = vmatprep.subr.bf16.mxu0 0
        %907 = vmatpush1.bf16.msra.mxu0 0
        %908 = vmatprep.subr.bf16.mxu0 0
        %909 = vmatpush1.bf16.msra.mxu0 0
        %910 = vmatprep.subr.bf16.mxu0 0
        %911 = vmatpush1.bf16.msra.mxu0 0
        %912 = vmatprep.subr.bf16.mxu0 0
        %913 = vmatpush1.bf16.msra.mxu0 %v896
        %914 = vmatprep.subr.bf16.mxu0 0
        %915 = vmatpush2.bf16.msra.mxu0 0
        %916 = vmatprep.subr.bf16.mxu0 0
        %917 = vmatpush2.bf16.msra.mxu0 0
        %918 = vmatprep.subr.bf16.mxu0 0
        %919 = vmatpush2.bf16.msra.mxu0 0
        %920 = vmatprep.subr.bf16.mxu0 0
        %921 = vmatpush2.bf16.msra.mxu0 0
        %922 = vmatprep.subr.bf16.mxu0 0
        %923 = vmatpush2.bf16.msra.mxu0 0
        %924 = vmatprep.subr.bf16.mxu0 0
        %925 = vmatpush2.bf16.msra.mxu0 0
        %926 = vmatprep.subr.bf16.mxu0 0
        %927 = vmatpush2.bf16.msra.mxu0 0
        %928 = vmatprep.subr.bf16.mxu0 0
        %929 = vmatpush2.bf16.msra.mxu0 0
        %930 = vmatprep.mubr.bf16.mxu0 0
        %931 = vmatmul.mubr.bf16.gmra.mxu0 %v893
        %v932 = vpop.f32.mrf.mxu0
        %v933 = vadd.f32 0.0, %v932
        %v934 = vpop.f32.mrf.mxu0
        %v935 = vpop.f32.mrf.mxu0
        %v936 = vpop.f32.mrf.mxu0
        %937 = vdwg.mxu0
        %939 = vrot.lane.b32.xlu0 %v713, 8
        %v940 = vpop.permute.xlu0 %939
        %943 = vrot.lane.b32.xlu0 %v823, 16
        %v944 = vpop.permute.xlu0 %943
        %947 = vrot.lane.b32.xlu0 %v933, 24
        %v948 = vpop.permute.xlu0 %947
        %v950 = vsel %vm501, %v602, %v940
        %vm951 = vcmask 130048
        %v952 = vsel %vm951, %v950, %v944
        %vm953 = vcmask 195584
        %v954 = vsel %vm953, %v952, %v948
        %v955 = vpack.c.bf16 %v954, %v954
        %v956 = vld [vmem:[#allocation8] sm:$0xf]
        %v957 = vld [vmem:[#allocation8 + $0x4] sm:$0xf]
        %v958 = vld [vmem:[#allocation8 + $0x8] sm:$0xf]
        %v959 = vld [vmem:[#allocation8 + $0xc] sm:$0xf]
        %v964 = vunpack.c.l.b16 %v956
        %v965 = vunpack.c.l.b16 %v957
        %v966 = vunpack.c.l.b16 %v958
        %v967 = vunpack.c.l.b16 %v959
        %v968 = vpack.c.b16 %v965, %v964
        %v969 = vpack.c.b16 %v967, %v966
        %v973 = vsel %vm397, %v955, 0
        %975 = vmatprep.subr.bf16.mxu0 0
        %976 = vmatpush1.bf16.msra.mxu0 0
        %977 = vmatprep.subr.bf16.mxu0 0
        %978 = vmatpush1.bf16.msra.mxu0 0
        %979 = vmatprep.subr.bf16.mxu0 0
        %980 = vmatpush1.bf16.msra.mxu0 0
        %981 = vmatprep.subr.bf16.mxu0 0
        %982 = vmatpush1.bf16.msra.mxu0 0
        %983 = vmatprep.subr.bf16.mxu0 0
        %984 = vmatpush1.bf16.msra.mxu0 0
        %985 = vmatprep.subr.bf16.mxu0 0
        %986 = vmatpush1.bf16.msra.mxu0 0
        %987 = vmatprep.subr.bf16.mxu0 0
        %988 = vmatpush1.bf16.msra.mxu0 %v969
        %989 = vmatprep.subr.bf16.mxu0 0
        %990 = vmatpush1.bf16.msra.mxu0 %v968
        %991 = vmatprep.subr.bf16.mxu0 0
        %992 = vmatpush2.bf16.msra.mxu0 0
        %993 = vmatprep.subr.bf16.mxu0 0
        %994 = vmatpush2.bf16.msra.mxu0 0
        %995 = vmatprep.subr.bf16.mxu0 0
        %996 = vmatpush2.bf16.msra.mxu0 0
        %997 = vmatprep.subr.bf16.mxu0 0
        %998 = vmatpush2.bf16.msra.mxu0 0
        %999 = vmatprep.subr.bf16.mxu0 0
        %1000 = vmatpush2.bf16.msra.mxu0 0
        %1001 = vmatprep.subr.bf16.mxu0 0
        %1002 = vmatpush2.bf16.msra.mxu0 0
        %1003 = vmatprep.subr.bf16.mxu0 0
        %1004 = vmatpush2.bf16.msra.mxu0 0
        %1005 = vmatprep.subr.bf16.mxu0 0
        %1006 = vmatpush2.bf16.msra.mxu0 0
        %1007 = vmatprep.mubr.bf16.mxu0 0
        %1008 = vmatmul.mubr.bf16.gmra.mxu0 %v973
        %v1009 = vpop.f32.mrf.mxu0
        %v1010 = vadd.f32 0.0, %v1009
        %v1011 = vpop.f32.mrf.mxu0
        %v1012 = vpop.f32.mrf.mxu0
        %v1013 = vpop.f32.mrf.mxu0
        %1014 = vdwg.mxu0
        %v1015 = vadd.f32 %v389, %v1010
        %v1016 = vmul.f32 %v1015, %v1015
        %v1017 = vsel %vm397, %v1016, 0.0
        %1018 = vadd.xlane.f32.xlu0 %v1017
        %v1019 = vpop.xlane.xlu0 %1018
        %v1020 = vmul.f32 %v1019, %v401
        %v1021 = vadd.f32 %v1020, 1e-05
        %v1022 = vrsqrt.pop %v1021
        %v1023 = vmul.f32 %v1015, %v1022
        %v1024 = vld [vmem:[%s6] sm:$0x1]
        %v1026 = vlaneseq
        %v1027 = vshrl.u32 %v1026, 7
        %v1028 = vsub.s32 0, %v1027
        %v1029 = vrot.slane %v1024, %v1028
        %v1031 = vmul.f32 %v1023, %v1029
        %v1032 = vpack.c.bf16 %v1031, %v1031
        %v1033 = vld [vmem:[%s7] sm:$0xff]
        %v1034 = vld [vmem:[%s7 + $0x8] sm:$0xff]
        %v1035 = vld [vmem:[%s7 + $0x10] sm:$0xff]
        %v1036 = vld [vmem:[%s7 + $0x18] sm:$0xff]
        %v1041 = vunpack.c.l.b16 %v1033
        %v1042 = vunpack.c.h.b16 %v1033
        %v1043 = vunpack.c.l.b16 %v1034
        %v1044 = vunpack.c.h.b16 %v1034
        %v1045 = vunpack.c.l.b16 %v1035
        %v1046 = vunpack.c.h.b16 %v1035
        %v1047 = vunpack.c.l.b16 %v1036
        %v1048 = vunpack.c.h.b16 %v1036
        %v1049 = vpack.c.b16 %v1043, %v1041
        %v1050 = vpack.c.b16 %v1044, %v1042
        %v1051 = vpack.c.b16 %v1047, %v1045
        %v1052 = vpack.c.b16 %v1048, %v1046
        %v1058 = vsel %vm397, %v1032, 0
        %1060 = vmatprep.subr.bf16.mxu0 0
        %1061 = vmatpush1.bf16.msra.mxu0 0
        %1062 = vmatprep.subr.bf16.mxu0 0
        %1063 = vmatpush1.bf16.msra.mxu0 0
        %1064 = vmatprep.subr.bf16.mxu0 0
        %1065 = vmatpush1.bf16.msra.mxu0 0
        %1066 = vmatprep.subr.bf16.mxu0 0
        %1067 = vmatpush1.bf16.msra.mxu0 0
        %1068 = vmatprep.subr.bf16.mxu0 0
        %1069 = vmatpush1.bf16.msra.mxu0 0
        %1070 = vmatprep.subr.bf16.mxu0 0
        %1071 = vmatpush1.bf16.msra.mxu0 0
        %1072 = vmatprep.subr.bf16.mxu0 %v1052
        %1073 = vmatpush1.bf16.msra.mxu0 %v1051
        %1074 = vmatprep.subr.bf16.mxu0 %v1050
        %1075 = vmatpush1.bf16.msra.mxu0 %v1049
        %1076 = vmatprep.subr.bf16.mxu0 0
        %1077 = vmatpush2.bf16.msra.mxu0 0
        %1078 = vmatprep.subr.bf16.mxu0 0
        %1079 = vmatpush2.bf16.msra.mxu0 0
        %1080 = vmatprep.subr.bf16.mxu0 0
        %1081 = vmatpush2.bf16.msra.mxu0 0
        %1082 = vmatprep.subr.bf16.mxu0 0
        %1083 = vmatpush2.bf16.msra.mxu0 0
        %1084 = vmatprep.subr.bf16.mxu0 0
        %1085 = vmatpush2.bf16.msra.mxu0 0
        %1086 = vmatprep.subr.bf16.mxu0 0
        %1087 = vmatpush2.bf16.msra.mxu0 0
        %1088 = vmatprep.subr.bf16.mxu0 0
        %1089 = vmatpush2.bf16.msra.mxu0 0
        %1090 = vmatprep.subr.bf16.mxu0 0
        %1091 = vmatpush2.bf16.msra.mxu0 0
        %1092 = vmatprep.mubr.bf16.mxu0 0
        %1093 = vmatmul.mubr.bf16.gmra.mxu0 %v1058
        %v1094 = vpop.f32.mrf.mxu0
        %v1095 = vadd.f32 0.0, %v1094
        %v1096 = vpop.f32.mrf.mxu0
        %v1097 = vadd.f32 0.0, %v1096
        %v1098 = vpop.f32.mrf.mxu0
        %v1099 = vpop.f32.mrf.mxu0
        %1100 = vdwg.mxu0
        %v1101 = vxor.u32 %v1095, 2147483648
        %v1102 = vmul.f32 %v1101, 1.442695
        %v1103 = vpow.pop %v1102
        %v1104 = vadd.f32 %v1103, 1.0
        %v1105 = vrcp.pop %v1104
        %v1106 = vmul.f32 1.0, %v1105
        %v1107 = vmul.f32 %v1095, %v1106
        %1110 = vrot.lane.b32.xlu0 %v1095, 32
        %v1111 = vpop.permute.xlu0 %1110
        %1112 = vrot.lane.b32.xlu0 %v1097, 32
        %v1113 = vpop.permute.xlu0 %1112
        %v1114 = vsel %vm397, %v1111, %v1113
        %v1116 = vmul.f32 %v1107, %v1114
        %v1117 = vpack.c.bf16 %v1116, %v1116
        %v1118 = vld [vmem:[%s8] sm:$0xf]
        %v1119 = vld [vmem:[%s8 + $0x4] sm:$0xf]
        %v1120 = vld [vmem:[%s8 + $0x8] sm:$0xf]
        %v1121 = vld [vmem:[%s8 + $0xc] sm:$0xf]
        %v1122 = vld [vmem:[%s8 + $0x10] sm:$0xf]
        %v1123 = vld [vmem:[%s8 + $0x14] sm:$0xf]
        %v1124 = vld [vmem:[%s8 + $0x18] sm:$0xf]
        %v1125 = vld [vmem:[%s8 + $0x1c] sm:$0xf]
        %v1126 = vld [vmem:[%s8 + $0x20] sm:$0xf]
        %v1127 = vld [vmem:[%s8 + $0x24] sm:$0xf]
        %v1128 = vld [vmem:[%s8 + $0x28] sm:$0xf]
        %v1129 = vld [vmem:[%s8 + $0x2c] sm:$0xf]
        %v1142 = vunpack.c.l.b16 %v1118
        %v1143 = vunpack.c.l.b16 %v1119
        %v1144 = vunpack.c.l.b16 %v1120
        %v1145 = vunpack.c.l.b16 %v1121
        %v1146 = vunpack.c.l.b16 %v1122
        %v1147 = vunpack.c.l.b16 %v1123
        %v1148 = vunpack.c.l.b16 %v1124
        %v1149 = vunpack.c.l.b16 %v1125
        %v1150 = vunpack.c.l.b16 %v1126
        %v1151 = vunpack.c.l.b16 %v1127
        %v1152 = vunpack.c.l.b16 %v1128
        %v1153 = vunpack.c.l.b16 %v1129
        %v1154 = vpack.c.b16 %v1143, %v1142
        %v1155 = vpack.c.b16 %v1145, %v1144
        %v1156 = vpack.c.b16 %v1147, %v1146
        %v1157 = vpack.c.b16 %v1149, %v1148
        %v1158 = vpack.c.b16 %v1151, %v1150
        %v1159 = vpack.c.b16 %v1153, %v1152
        %vm1166 = vcmask 785408
        %v1168 = vsel %vm1166, %v1117, 0
        %1170 = vmatprep.subr.bf16.mxu0 0
        %1171 = vmatpush1.bf16.msra.mxu0 0
        %1172 = vmatprep.subr.bf16.mxu0 0
        %1173 = vmatpush1.bf16.msra.mxu0 0
        %1174 = vmatprep.subr.bf16.mxu0 0
        %1175 = vmatpush1.bf16.msra.mxu0 %v1159
        %1176 = vmatprep.subr.bf16.mxu0 0
        %1177 = vmatpush1.bf16.msra.mxu0 %v1158
        %1178 = vmatprep.subr.bf16.mxu0 0
        %1179 = vmatpush1.bf16.msra.mxu0 %v1157
        %1180 = vmatprep.subr.bf16.mxu0 0
        %1181 = vmatpush1.bf16.msra.mxu0 %v1156
        %1182 = vmatprep.subr.bf16.mxu0 0
        %1183 = vmatpush1.bf16.msra.mxu0 %v1155
        %1184 = vmatprep.subr.bf16.mxu0 0
        %1185 = vmatpush1.bf16.msra.mxu0 %v1154
        %1186 = vmatprep.subr.bf16.mxu0 0
        %1187 = vmatpush2.bf16.msra.mxu0 0
        %1188 = vmatprep.subr.bf16.mxu0 0
        %1189 = vmatpush2.bf16.msra.mxu0 0
        %1190 = vmatprep.subr.bf16.mxu0 0
        %1191 = vmatpush2.bf16.msra.mxu0 0
        %1192 = vmatprep.subr.bf16.mxu0 0
        %1193 = vmatpush2.bf16.msra.mxu0 0
        %1194 = vmatprep.subr.bf16.mxu0 0
        %1195 = vmatpush2.bf16.msra.mxu0 0
        %1196 = vmatprep.subr.bf16.mxu0 0
        %1197 = vmatpush2.bf16.msra.mxu0 0
        %1198 = vmatprep.subr.bf16.mxu0 0
        %1199 = vmatpush2.bf16.msra.mxu0 0
        %1200 = vmatprep.subr.bf16.mxu0 0
        %1201 = vmatpush2.bf16.msra.mxu0 0
        %1202 = vmatprep.mubr.bf16.mxu0 0
        %1203 = vmatmul.mubr.bf16.gmra.mxu0 %v1168
        %v1204 = vpop.f32.mrf.mxu0
        %v1205 = vadd.f32 0.0, %v1204
        %v1206 = vpop.f32.mrf.mxu0
        %v1207 = vpop.f32.mrf.mxu0
        %v1208 = vpop.f32.mrf.mxu0
        %1209 = vdwg.mxu0
        %v1210 = vadd.f32 %v1015, %v1205
        %1211 = vst.msk [vmem:[%s387] sm:$0xff] %vm397, %v1210
        %s1212 = sand.u32 %s230, 1
        %s1213 = scalar_lea.sflag [#allocation4], %s1212
        %s1214 = sand.u32 %s230, 1
        %s1215 = smul.addr %s1214, 8
        %s1216 = scalar_lea.vmem [#allocation10], %s1215
        // Predicated region
        $region73: #{tpu_custom_call.1} parent=55 // pred_check
          %p1217 = pneg %p240
        $region74: #{tpu_custom_call.1} parent=55 // pred_check_branch
          %1219 = sbr.rel (%p1217) target = $region76
        $region75: #{tpu_custom_call.1} parent=55 // pred_region
          %s1221 = ssub.s32 128, 128
          %1222 = vsyncadd %s1213, %s1221
          %s1223 = smul.addr %s28, 128
          %s1224 = scalar_lea.hbm %s9, %s1223
          %s1226 = sshll.u32 %s1216, 4
          %s1227 = int_to_ptr.vmem [resolvable:$true] %s1226
          %1229 = dma.vmem_to_hbm [thread:$0]  %s1227, 128, %s1224, %s1213
        $region76: #{tpu_custom_call.1} parent=55 // pred_fallthru
          _
      $region56: #{tpu_custom_call.1} parent=5 // pred_fallthru
        _
      %p1230 = scmp.le.s32.totalorder 2, %s23
      // Predicated region
      $region77: #{tpu_custom_call.1} parent=5 // pred_check
        %p1231 = pneg %p1230
      $region78: #{tpu_custom_call.1} parent=5 // pred_check_branch
        %1233 = sbr.rel (%p1231) target = $region80
      $region79: #{tpu_custom_call.1} parent=5 // pred_region
        %s1234 = ssub.s32 %s23, 2
        // Predicated region
        $region81: #{tpu_custom_call.1} parent=79 // pred_check
          %p1235 = pneg %p246
        $region82: #{tpu_custom_call.1} parent=79 // pred_check_branch
          %1237 = sbr.rel (%p1235) target = $region84
        $region83: #{tpu_custom_call.1} parent=79 // pred_region
          %s1238 = sand.u32 %s231, 1
          %s1239 = scalar_lea.sflag [#allocation4], %s1238
          %s1240 = sand.u32 %s231, 1
          %s1241 = smul.addr %s1240, 8
          %s1242 = scalar_lea.vmem [#allocation10], %s1241
          %1243 = dma.done %s1239, 128
        $region84: #{tpu_custom_call.1} parent=79 // pred_fallthru
          _
      $region80: #{tpu_custom_call.1} parent=5 // pred_fallthru
        _
    $region6: #{tpu_custom_call.1} parent=1 // loop_footer
      %s27 = sadd.s32 1, %s23
    $region7: #{tpu_custom_call.1} parent=1 // loop_footer_branch
      %22 = sbr.rel target = $region3
    $region8: #{tpu_custom_call.1} parent=1 // loop_exit
      _
    %1244 = vsyncpa [#allocation3], 1
    %s1245 = scalar_lea.sflag [#allocation3], 1
    %1246 = vsyncpa %s1245, 1
    %1247 = vsyncpa [#allocation6], 1
    %1248 = vsyncpa [#allocation9], 1
    %1249 = vsyncpa [#allocation4], 1
    %s1250 = scalar_lea.sflag [#allocation4], 1
    %1251 = vsyncpa %s1250, 1

</llo_original>
